<compile_context>
chip_gen: v5e
topology: v5e:2x2
jax: 0.10.0
libtpu: 0.0.40
codegen_flags: <defaults>
</compile_context>

<pallas_src>
import jax
import jax.numpy as jnp
from jax import lax
from jax.experimental import pallas as pl
from jax.experimental.pallas import tpu as pltpu


def _round_up(x, m):
    return ((x + m - 1) // m) * m


def _pad2(a, rows, cols):
    return jnp.pad(a, ((0, rows - a.shape[0]), (0, cols - a.shape[1])))


# ----------------------------------------------------------------------------
# Kernel 1 ("prep"): fused GRU weight evolution + X @ W + dinv row-scaling.
#   grid = (Np // tm,) over row tiles of X ("arbitrary": the GRU result lives in
#   a VMEM scratch that must persist sequentially across grid steps).
#
#   w0      : (Cp, Cp)    initial weight (lane-padded)
#   wih/whh : (Cp, 3Cp)   GRU input/hidden weights, pre-transposed, each gate block
#                         lane-padded to Cp (so the r/z/n slices are lane-aligned)
#   bih/bhh : (1, 3Cp)
#   x       : (tm, Cp)    node-feature row tile
#   dinv    : (tm, 1)     1/sqrt(deg) for these rows
#   y       : (tm, Cp)    bf16 output tile:  dinv * (x @ W_new)
#   w_out   : (Cp, Cp)    evolved weight (written once)
# ----------------------------------------------------------------------------
def prep_kernel(w0_ref, wih_ref, whh_ref, bih_ref, bhh_ref, x_ref, dinv_ref,
                y_ref, w_out_ref, w_scr):
    cp = w0_ref.shape[0]

    @pl.when(pl.program_id(0) == 0)
    def _():
        w0 = w0_ref[...]
        gi = jnp.dot(w0, wih_ref[...], preferred_element_type=jnp.float32) + bih_ref[...]
        gh = jnp.dot(w0, whh_ref[...], preferred_element_type=jnp.float32) + bhh_ref[...]
        # gate slices are lane-aligned: cp is a multiple of 128
        r = jax.nn.sigmoid(gi[:, 0:cp] + gh[:, 0:cp])
        z = jax.nn.sigmoid(gi[:, cp:2 * cp] + gh[:, cp:2 * cp])
        n = jnp.tanh(gi[:, 2 * cp:3 * cp] + r * gh[:, 2 * cp:3 * cp])
        w_scr[...] = (1.0 - z) * n + z * w0

    xw = jnp.dot(x_ref[...], w_scr[...], preferred_element_type=jnp.float32)
    y_ref[...] = (dinv_ref[...] * xw).astype(y_ref.dtype)

    @pl.when(pl.program_id(0) == pl.num_programs(0) - 1)
    def _():
        w_out_ref[...] = w_scr[...].astype(w_out_ref.dtype)


# ----------------------------------------------------------------------------
# Kernel 2: tiled GCN aggregation + final Linear.
#   grid = (Np // tm, Np // tk), semantics ("parallel", "arbitrary")
#
#   at    : (tm, tk) int8 tile of (A + I)^T (binarized, self loops folded in)
#   y     : (tk, Cp) bf16 tile of dinv-scaled xw
#   dinv  : (tm, 1)  f32  1/sqrt(deg) for the output rows
#   wlin  : (Cp, Coutp) f32, blin : (1, Coutp) f32
#   out   : (tm, Coutp) f32 (lane-dense)
#   acc   : (tm, Cp) f32 VMEM scratch accumulator
# ----------------------------------------------------------------------------
def gcn_agg_kernel(at_ref, y_ref, dinv_ref, wlin_ref, blin_ref, out_ref, acc_ref):
    k = pl.program_id(1)

    @pl.when(k == 0)
    def _():
        acc_ref[...] = jnp.zeros_like(acc_ref)

    a = at_ref[...].astype(jnp.bfloat16)          # 0/1 -> exact in bf16
    acc_ref[...] += jnp.dot(a, y_ref[...], preferred_element_type=jnp.float32)

    @pl.when(k == pl.num_programs(1) - 1)
    def _():
        agg = dinv_ref[...] * acc_ref[...]
        out = jnp.dot(agg, wlin_ref[...], preferred_element_type=jnp.float32) + blin_ref[...]
        out_ref[...] = out.astype(out_ref.dtype)


# ----------------------------------------------------------------------------
# Wrapper
# ----------------------------------------------------------------------------
def evolve_gcno_forward(X, adj, params, tile_n=None):
    N, C = X.shape
    Cout = params["lin_w"].shape[0]
    Cp = _round_up(C, 128)
    Coutp = _round_up(Cout, 128)

    if tile_n is None:
        tile_n = min(512, _round_up(N, 128))
    tile_n = max(128, _round_up(tile_n, 128))
    Np = _round_up(N, tile_n)

    # --- host-side (cheap) preprocessing -----------------------------------
    # Binarized adjacency with forced unit diagonal (self loops), transposed so the
    # in-kernel contraction is a plain row-major (tm, tk) @ (tk, Cp).
    a_bin = (adj != 0).astype(jnp.float32)
    a_hat = jnp.maximum(a_bin, jnp.eye(N, dtype=jnp.float32))
    deg = a_hat.sum(axis=0)                           # 1 + in-degree (target index)
    dinv = 1.0 / jnp.sqrt(deg)
    dinv_p = jnp.concatenate(
        [dinv, jnp.ones((Np - N,), jnp.float32)]).reshape(Np, 1)
    a_hat_t_p = _pad2(a_hat.T, Np, Np).astype(jnp.int8)

    x_p = _pad2(X.astype(jnp.float32), Np, Cp)

    def pad_gru(w, b):                                # w: (3C, C), b: (3C,)
        w_blocks, b_blocks = [], []
        for g in range(3):                            # gate order r, z, n
            wg_t = w[g * C:(g + 1) * C, :].T          # (C, C) : input -> gate
            w_blocks.append(_pad2(wg_t, Cp, Cp))
            b_blocks.append(jnp.pad(b[g * C:(g + 1) * C], (0, Cp - C)))
        return (jnp.concatenate(w_blocks, axis=1),
                jnp.concatenate(b_blocks).reshape(1, 3 * Cp))

    wih_p, bih_p = pad_gru(params["gru_w_ih"], params["gru_b_ih"])
    whh_p, bhh_p = pad_gru(params["gru_w_hh"], params["gru_b_hh"])
    w0_p = _pad2(params["initial_weight"], Cp, Cp)

    wlin_p = _pad2(params["lin_w"].T, Cp, Coutp)      # (Cp, Coutp)
    blin_p = jnp.pad(params["lin_b"], (0, Coutp - Cout)).reshape(1, Coutp)

    # --- kernel 1: GRU (once) + dinv * (X @ W) ------------------------------
    n_row_tiles = Np // tile_n
    y_pad, w_pad = pl.pallas_call(
        prep_kernel,
        out_shape=(jax.ShapeDtypeStruct((Np, Cp), jnp.bfloat16),
                   jax.ShapeDtypeStruct((Cp, Cp), jnp.float32)),
        grid_spec=pltpu.PrefetchScalarGridSpec(
            num_scalar_prefetch=0,
            grid=(n_row_tiles,),
            in_specs=[
                pl.BlockSpec((Cp, Cp), lambda i: (0, 0)),         # w0
                pl.BlockSpec((Cp, 3 * Cp), lambda i: (0, 0)),     # wih
                pl.BlockSpec((Cp, 3 * Cp), lambda i: (0, 0)),     # whh
                pl.BlockSpec((1, 3 * Cp), lambda i: (0, 0)),      # bih
                pl.BlockSpec((1, 3 * Cp), lambda i: (0, 0)),      # bhh
                pl.BlockSpec((tile_n, Cp), lambda i: (i, 0)),     # x tile
                pl.BlockSpec((tile_n, 1), lambda i: (i, 0)),      # dinv tile
            ],
            out_specs=[
                pl.BlockSpec((tile_n, Cp), lambda i: (i, 0)),     # y tile
                pl.BlockSpec((Cp, Cp), lambda i: (0, 0)),         # evolved W
            ],
            scratch_shapes=[pltpu.VMEM((Cp, Cp), jnp.float32)]),
        compiler_params=pltpu.CompilerParams(
            dimension_semantics=("arbitrary",)),
    )(w0_p, wih_p, whh_p, bih_p, bhh_p, x_p, dinv_p)

    # --- kernel 2: tiled aggregation + linear -------------------------------
    out_pad = pl.pallas_call(
        gcn_agg_kernel,
        out_shape=jax.ShapeDtypeStruct((Np, Coutp), jnp.float32),
        grid_spec=pltpu.PrefetchScalarGridSpec(
            num_scalar_prefetch=0,
            grid=(Np // tile_n, Np // tile_n),
            in_specs=[
                pl.BlockSpec((tile_n, tile_n), lambda i, k: (i, k)),  # (A+I)^T int8
                pl.BlockSpec((tile_n, Cp), lambda i, k: (k, 0)),      # y (bf16)
                pl.BlockSpec((tile_n, 1), lambda i, k: (i, 0)),       # dinv rows
                pl.BlockSpec((Cp, Coutp), lambda i, k: (0, 0)),       # wlin
                pl.BlockSpec((1, Coutp), lambda i, k: (0, 0)),        # blin
            ],
            out_specs=pl.BlockSpec((tile_n, Coutp), lambda i, k: (i, 0)),
            scratch_shapes=[pltpu.VMEM((tile_n, Cp), jnp.float32)]),
        compiler_params=pltpu.CompilerParams(
            dimension_semantics=("parallel", "arbitrary")),
    )(a_hat_t_p, y_pad, dinv_p, wlin_p, blin_p)

    return out_pad[:N, :Cout], w_pad[:C, :C]


# ----------------------------------------------------------------------------
# Pure-JAX reference (exact module semantics, all f32)
# ----------------------------------------------------------------------------
def evolve_gcno_reference(X, adj, params):
    C = params["initial_weight"].shape[0]
    w0 = params["initial_weight"]
    gi = w0 @ params["gru_w_ih"].T + params["gru_b_ih"]
    gh = w0 @ params["gru_w_hh"].T + params["gru_b_hh"]
    r = jax.nn.sigmoid(gi[:, :C] + gh[:, :C])
    z = jax.nn.sigmoid(gi[:, C:2 * C] + gh[:, C:2 * C])
    n = jnp.tanh(gi[:, 2 * C:] + r * gh[:, 2 * C:])
    w_new = (1.0 - z) * n + z * w0

    N = X.shape[0]
    a_hat = jnp.where(adj != 0.0, 1.0, 0.0)
    a_hat = jnp.where(jnp.eye(N, dtype=bool), 1.0, a_hat)
    deg = a_hat.sum(axis=0)
    dinv = 1.0 / jnp.sqrt(deg)
    p = a_hat * dinv[:, None] * dinv[None, :]
    xw = X @ w_new
    agg = p.T @ xw
    return agg @ params["lin_w"].T + params["lin_b"], w_new


# ----------------------------------------------------------------------------
# Deterministic synthetic parameters
# ----------------------------------------------------------------------------
def init_params(key, in_channels, out_channels):
    C, Cout = in_channels, out_channels
    ks = jax.random.split(key, 7)
    glorot_scale = jnp.sqrt(6.0 / (C + C))
    k_gru = 1.0 / jnp.sqrt(C)
    k_lin = 1.0 / jnp.sqrt(C)
    return {
        "initial_weight": jax.random.uniform(ks[0], (C, C), jnp.float32,
                                             -glorot_scale, glorot_scale),
        "gru_w_ih": jax.random.uniform(ks[1], (3 * C, C), jnp.float32, -k_gru, k_gru),
        "gru_w_hh": jax.random.uniform(ks[2], (3 * C, C), jnp.float32, -k_gru, k_gru),
        "gru_b_ih": jax.random.uniform(ks[3], (3 * C,), jnp.float32, -k_gru, k_gru),
        "gru_b_hh": jax.random.uniform(ks[4], (3 * C,), jnp.float32, -k_gru, k_gru),
        "lin_w": jax.random.uniform(ks[5], (Cout, C), jnp.float32, -k_lin, k_lin),
        "lin_b": jax.random.uniform(ks[6], (Cout,), jnp.float32, -k_lin, k_lin),
    }


if __name__ == "__main__":
    key = jax.random.PRNGKey(0)
    N, C, Cout = 200, 32, 16            # nodes, in_channels, out_channels

    k_x, k_a, k_p = jax.random.split(key, 3)
    X = jax.random.normal(k_x, (N, C), jnp.float32)

    # Random symmetric 0/1 adjacency with empty diagonal.
    upper = (jax.random.uniform(k_a, (N, N)) > 0.8).astype(jnp.float32)
    upper = jnp.triu(upper, k=1)
    adj = upper + upper.T

    params = init_params(k_p, C, Cout)

    # tile_n=128 forces a 2x2 grid (Np=256) so the tiled accumulator path is exercised.
    y, w_new = evolve_gcno_forward(X, adj, params, tile_n=128)
    y = jax.block_until_ready(y)

    y_ref, w_ref = evolve_gcno_reference(X, adj, params)

    # GRU / weight evolution runs in f32 -> tight tolerance.
    assert jnp.allclose(w_new, w_ref, atol=1e-3, rtol=1e-3), "W mismatch vs reference"
    # Aggregation path intentionally uses bf16 operands (f32 accumulation) -> looser tol.
    assert jnp.allclose(y, y_ref, atol=5e-2, rtol=5e-2), "Y mismatch vs reference"

    print("KERNEL_OK")
</pallas_src>

<mosaic_0001>
module attributes {stable_mosaic.version = 11 : i64} {
  func.func @prep_kernel(%arg0: i32, %arg1: memref<128x128xf32, #tpu.memory_space<vmem>>, %arg2: memref<128x384xf32, #tpu.memory_space<vmem>>, %arg3: memref<128x384xf32, #tpu.memory_space<vmem>>, %arg4: memref<1x384xf32, #tpu.memory_space<vmem>>, %arg5: memref<1x384xf32, #tpu.memory_space<vmem>>, %arg6: memref<128x128xf32, #tpu.memory_space<vmem>>, %arg7: memref<128x1xf32, #tpu.memory_space<vmem>>, %arg8: memref<128x128xbf16, #tpu.memory_space<vmem>>, %arg9: memref<128x128xf32, #tpu.memory_space<vmem>>, %arg10: memref<128x128xf32, #tpu.memory_space<vmem>>) attributes {dimension_semantics = [#tpu.dimension_semantics<arbitrary>], iteration_bounds = array<i64: 2>, scalar_prefetch = 0 : i64, scratch_operands = 1 : i64, tpu.core_type = #tpu.core_type<tc>, window_params = [{pipeline_mode = #tpu.pipeline_mode<synchronous>, transform_indices = @transform_0, window_bounds = array<i64: 128, 128>}, {pipeline_mode = #tpu.pipeline_mode<synchronous>, transform_indices = @transform_1, window_bounds = array<i64: 128, 384>}, {pipeline_mode = #tpu.pipeline_mode<synchronous>, transform_indices = @transform_2, window_bounds = array<i64: 128, 384>}, {pipeline_mode = #tpu.pipeline_mode<synchronous>, transform_indices = @transform_3, window_bounds = array<i64: 1, 384>}, {pipeline_mode = #tpu.pipeline_mode<synchronous>, transform_indices = @transform_4, window_bounds = array<i64: 1, 384>}, {transform_indices = @transform_5, window_bounds = array<i64: 128, 128>}, {transform_indices = @transform_6, window_bounds = array<i64: 128, 1>}, {transform_indices = @transform_7, window_bounds = array<i64: 128, 128>}, {pipeline_mode = #tpu.pipeline_mode<synchronous>, transform_indices = @transform_8, window_bounds = array<i64: 128, 128>}]} {
    %c0_i32 = arith.constant 0 : i32
    %0 = arith.cmpi eq, %arg0, %c0_i32 : i32
    %1 = arith.extui %0 : i1 to i32
    %c0_i32_0 = arith.constant 0 : i32
    %2 = arith.cmpi ne, %1, %c0_i32_0 : i32
    scf.if %2 {
      %c0_9 = arith.constant 0 : index
      %c0_10 = arith.constant 0 : index
      %14 = vector.load %arg1[%c0_9, %c0_10] : memref<128x128xf32, #tpu.memory_space<vmem>>, vector<128x128xf32>
      %c0_11 = arith.constant 0 : index
      %c0_12 = arith.constant 0 : index
      %15 = vector.load %arg2[%c0_11, %c0_12] : memref<128x384xf32, #tpu.memory_space<vmem>>, vector<128x384xf32>
      %cst_13 = arith.constant dense<0.000000e+00> : vector<128x384xf32>
      %16 = tpu.matmul %14, %15, %cst_13 {dimension_numbers = #tpu.dot_dimension_numbers<[1], [0], [0], [1], [0, 0, 1, 1], [], []>} : vector<128x128xf32>, vector<128x384xf32>, vector<128x384xf32> -> vector<128x384xf32>
      %c0_14 = arith.constant 0 : index
      %c0_15 = arith.constant 0 : index
      %17 = vector.load %arg4[%c0_14, %c0_15] : memref<1x384xf32, #tpu.memory_space<vmem>>, vector<1x384xf32>
      %18 = vector.broadcast %17 : vector<1x384xf32> to vector<128x384xf32>
      %19 = arith.addf %16, %18 : vector<128x384xf32>
      %c0_16 = arith.constant 0 : index
      %c0_17 = arith.constant 0 : index
      %20 = vector.load %arg3[%c0_16, %c0_17] : memref<128x384xf32, #tpu.memory_space<vmem>>, vector<128x384xf32>
      %cst_18 = arith.constant dense<0.000000e+00> : vector<128x384xf32>
      %21 = tpu.matmul %14, %20, %cst_18 {dimension_numbers = #tpu.dot_dimension_numbers<[1], [0], [0], [1], [0, 0, 1, 1], [], []>} : vector<128x128xf32>, vector<128x384xf32>, vector<128x384xf32> -> vector<128x384xf32>
      %c0_19 = arith.constant 0 : index
      %c0_20 = arith.constant 0 : index
      %22 = vector.load %arg5[%c0_19, %c0_20] : memref<1x384xf32, #tpu.memory_space<vmem>>, vector<1x384xf32>
      %23 = vector.broadcast %22 : vector<1x384xf32> to vector<128x384xf32>
      %24 = arith.addf %21, %23 : vector<128x384xf32>
      %25 = vector.extract_strided_slice %19 {offsets = [0, 0], sizes = [128, 128], strides = [1, 1]} : vector<128x384xf32> to vector<128x128xf32>
      %26 = vector.extract_strided_slice %24 {offsets = [0, 0], sizes = [128, 128], strides = [1, 1]} : vector<128x384xf32> to vector<128x128xf32>
      %27 = arith.addf %25, %26 : vector<128x128xf32>
      %28 = arith.negf %27 : vector<128x128xf32>
      %29 = math.exp %28 : vector<128x128xf32>
      %cst_21 = arith.constant 1.000000e+00 : f32
      %30 = vector.broadcast %cst_21 : f32 to vector<128x128xf32>
      %31 = arith.addf %30, %29 : vector<128x128xf32>
      %32 = arith.divf %30, %31 : vector<128x128xf32>
      %33 = vector.extract_strided_slice %19 {offsets = [0, 128], sizes = [128, 128], strides = [1, 1]} : vector<128x384xf32> to vector<128x128xf32>
      %34 = vector.extract_strided_slice %24 {offsets = [0, 128], sizes = [128, 128], strides = [1, 1]} : vector<128x384xf32> to vector<128x128xf32>
      %35 = arith.addf %33, %34 : vector<128x128xf32>
      %36 = arith.negf %35 : vector<128x128xf32>
      %37 = math.exp %36 : vector<128x128xf32>
      %cst_22 = arith.constant 1.000000e+00 : f32
      %38 = vector.broadcast %cst_22 : f32 to vector<128x128xf32>
      %39 = arith.addf %38, %37 : vector<128x128xf32>
      %40 = arith.divf %38, %39 : vector<128x128xf32>
      %41 = vector.extract_strided_slice %19 {offsets = [0, 256], sizes = [128, 128], strides = [1, 1]} : vector<128x384xf32> to vector<128x128xf32>
      %42 = vector.extract_strided_slice %24 {offsets = [0, 256], sizes = [128, 128], strides = [1, 1]} : vector<128x384xf32> to vector<128x128xf32>
      %43 = arith.mulf %32, %42 : vector<128x128xf32>
      %44 = arith.addf %41, %43 : vector<128x128xf32>
      %45 = math.tanh %44 : vector<128x128xf32>
      %cst_23 = arith.constant 1.000000e+00 : f32
      %46 = vector.broadcast %cst_23 : f32 to vector<128x128xf32>
      %47 = arith.subf %46, %40 : vector<128x128xf32>
      %48 = arith.mulf %47, %45 : vector<128x128xf32>
      %49 = arith.mulf %40, %14 : vector<128x128xf32>
      %50 = arith.addf %48, %49 : vector<128x128xf32>
      %c0_24 = arith.constant 0 : index
      %c0_25 = arith.constant 0 : index
      %51 = vector.load %arg10[%c0_24, %c0_25] : memref<128x128xf32, #tpu.memory_space<vmem>>, vector<128x128xf32>
      tpu.vector_store %arg10[%c0_24, %c0_25], %50 {strides = array<i32>} : memref<128x128xf32, #tpu.memory_space<vmem>>, vector<128x128xf32>,
    } else {
    }
    %c0 = arith.constant 0 : index
    %c0_1 = arith.constant 0 : index
    %3 = vector.load %arg6[%c0, %c0_1] : memref<128x128xf32, #tpu.memory_space<vmem>>, vector<128x128xf32>
    %c0_2 = arith.constant 0 : index
    %c0_3 = arith.constant 0 : index
    %4 = vector.load %arg10[%c0_2, %c0_3] : memref<128x128xf32, #tpu.memory_space<vmem>>, vector<128x128xf32>
    %cst = arith.constant dense<0.000000e+00> : vector<128x128xf32>
    %5 = tpu.matmul %3, %4, %cst {dimension_numbers = #tpu.dot_dimension_numbers<[1], [0], [0], [1], [0, 0, 1, 1], [], []>} : vector<128x128xf32>, vector<128x128xf32>, vector<128x128xf32> -> vector<128x128xf32>
    %c0_4 = arith.constant 0 : index
    %c0_5 = arith.constant 0 : index
    %6 = vector.load %arg7[%c0_4, %c0_5] : memref<128x1xf32, #tpu.memory_space<vmem>>, vector<128x1xf32>
    %7 = vector.broadcast %6 : vector<128x1xf32> to vector<128x128xf32>
    %8 = arith.mulf %7, %5 : vector<128x128xf32>
    %9 = arith.truncf %8 : vector<128x128xf32> to vector<128x128xbf16>
    %c0_6 = arith.constant 0 : index
    %c0_7 = arith.constant 0 : index
    %10 = vector.load %arg8[%c0_6, %c0_7] : memref<128x128xbf16, #tpu.memory_space<vmem>>, vector<128x128xbf16>
    tpu.vector_store %arg8[%c0_6, %c0_7], %9 {strides = array<i32>} : memref<128x128xbf16, #tpu.memory_space<vmem>>, vector<128x128xbf16>,
    %c1_i32 = arith.constant 1 : i32
    %11 = arith.cmpi eq, %arg0, %c1_i32 : i32
    %12 = arith.extui %11 : i1 to i32
    %c0_i32_8 = arith.constant 0 : i32
    %13 = arith.cmpi ne, %12, %c0_i32_8 : i32
    scf.if %13 {
      %c0_9 = arith.constant 0 : index
      %c0_10 = arith.constant 0 : index
      %14 = vector.load %arg10[%c0_9, %c0_10] : memref<128x128xf32, #tpu.memory_space<vmem>>, vector<128x128xf32>
      %c0_11 = arith.constant 0 : index
      %c0_12 = arith.constant 0 : index
      %15 = vector.load %arg9[%c0_11, %c0_12] : memref<128x128xf32, #tpu.memory_space<vmem>>, vector<128x128xf32>
      tpu.vector_store %arg9[%c0_11, %c0_12], %14 {strides = array<i32>} : memref<128x128xf32, #tpu.memory_space<vmem>>, vector<128x128xf32>,
    } else {
    }
    return
  }
  func.func @transform_0(%arg0: i32) -> (i32, i32) {
    %c0_i32 = arith.constant 0 : i32
    %c0_i32_0 = arith.constant 0 : i32
    %c0_i32_1 = arith.constant 0 : i32
    return %c0_i32, %c0_i32_0 : i32, i32
  }
  func.func @transform_1(%arg0: i32) -> (i32, i32) {
    %c0_i32 = arith.constant 0 : i32
    %c0_i32_0 = arith.constant 0 : i32
    %c0_i32_1 = arith.constant 0 : i32
    return %c0_i32, %c0_i32_0 : i32, i32
  }
  func.func @transform_2(%arg0: i32) -> (i32, i32) {
    %c0_i32 = arith.constant 0 : i32
    %c0_i32_0 = arith.constant 0 : i32
    %c0_i32_1 = arith.constant 0 : i32
    return %c0_i32, %c0_i32_0 : i32, i32
  }
  func.func @transform_3(%arg0: i32) -> (i32, i32) {
    %c0_i32 = arith.constant 0 : i32
    %c0_i32_0 = arith.constant 0 : i32
    %c0_i32_1 = arith.constant 0 : i32
    return %c0_i32, %c0_i32_0 : i32, i32
  }
  func.func @transform_4(%arg0: i32) -> (i32, i32) {
    %c0_i32 = arith.constant 0 : i32
    %c0_i32_0 = arith.constant 0 : i32
    %c0_i32_1 = arith.constant 0 : i32
    return %c0_i32, %c0_i32_0 : i32, i32
  }
  func.func @transform_5(%arg0: i32) -> (i32, i32) {
    %c0_i32 = arith.constant 0 : i32
    %c0_i32_0 = arith.constant 0 : i32
    return %arg0, %c0_i32 : i32, i32
  }
  func.func @transform_6(%arg0: i32) -> (i32, i32) {
    %c0_i32 = arith.constant 0 : i32
    %c0_i32_0 = arith.constant 0 : i32
    return %arg0, %c0_i32 : i32, i32
  }
  func.func @transform_7(%arg0: i32) -> (i32, i32) {
    %c0_i32 = arith.constant 0 : i32
    %c0_i32_0 = arith.constant 0 : i32
    return %arg0, %c0_i32 : i32, i32
  }
  func.func @transform_8(%arg0: i32) -> (i32, i32) {
    %c0_i32 = arith.constant 0 : i32
    %c0_i32_0 = arith.constant 0 : i32
    %c0_i32_1 = arith.constant 0 : i32
    return %c0_i32, %c0_i32_0 : i32, i32
  }
}

</mosaic_0001>

<llo_original>
// kernel: tpu_custom_call.1
$region0: #{tpu_custom_call.1}
  #allocation0 [shape = 'u32[]', space=smem, size = 0x4, offset = 0x4, fixed_abs, tag = 'smem constant byte address 0x4 - core index']
  #allocation1 [shape = 'u32[72,128]{1,0:T(1,128)}', space=vmem, size = 0x9000, scoped, tag = 'internal scratch']
  #allocation2 [shape = 'f32[128,128]{1,0:T(8,128)}', space=vmem, size = 0x10000, scoped, tag = 'scratch operand']
  %s0 = inlined_call_operand.hbm [shape: f32[128,128], index: 0, kind: input, shape index: {}]
  %s1 = inlined_call_operand.hbm [shape: f32[128,384], index: 1, kind: input, shape index: {}]
  %s2 = inlined_call_operand.hbm [shape: f32[128,384], index: 2, kind: input, shape index: {}]
  %s3 = inlined_call_operand.vmem [shape: f32[1,384], index: 3, kind: input, shape index: {}]
  %s4 = inlined_call_operand.hbm [shape: f32[1,384], index: 4, kind: input, shape index: {}]
  %s5 = inlined_call_operand.vmem [shape: f32[256,128], index: 5, kind: input, shape index: {}]
  %s6 = inlined_call_operand.vmem [shape: f32[256,1], index: 6, kind: input, shape index: {}]
  %s7 = inlined_call_operand.hbm [shape: bf16[256,128], index: 7, kind: output, shape index: {0}]
  %s8 = inlined_call_operand.hbm [shape: f32[128,128], index: 8, kind: output, shape index: {1}]
  %9 = xla_tuple %s7, %s8
  %s10 = sld [smem:[#allocation0]]
  $region93: #{tpu_custom_call.1} parent=0
    _
  %s12 = ssub.s32 1, %s10
  %s13 = scalar_select 0, %s12, %s10
  $region1: #{tpu_custom_call.1} parent=0
    #allocation3 [shape = 'u8[65536]{0}', space=vmem, size = 0x10000, scoped, tag = 'input window, operand 0, single buffered']
    #allocation4 [shape = 's32[2]{0}', space=sflag, size = 0x8, scoped, tag = 'scoped memory for tpu_custom_call.1']
    #allocation5 [shape = 's32[2]{0}', space=sflag, size = 0x8, scoped, tag = 'scoped memory for tpu_custom_call.1']
    #allocation6 [shape = 'u8[196608]{0}', space=vmem, size = 0x30000, scoped, tag = 'input window, operand 1, single buffered']
    #allocation7 [shape = 's32[1]{0}', space=sflag, size = 0x4, scoped, tag = 'scoped memory for tpu_custom_call.1']
    #allocation8 [shape = 'u8[196608]{0}', space=vmem, size = 0x30000, scoped, tag = 'input window, operand 2, single buffered']
    #allocation9 [shape = 'u8[1536]{0}', space=vmem, size = 0x800, scoped, tag = 'input window, operand 4, single buffered']
    #allocation10 [shape = 's32[1]{0}', space=sflag, size = 0x4, scoped, tag = 'scoped memory for tpu_custom_call.1']
    #allocation11 [shape = 'u8[65536]{0}', space=vmem, size = 0x10000, scoped, tag = 'output window, operand 0']
    #allocation12 [shape = 'u8[65536]{0}', space=vmem, size = 0x10000, scoped, tag = 'output window, operand 1, single buffered']
    #allocation13 [shape = 's32[1]{0}', space=sflag, size = 0x4, scoped, tag = 'scoped memory for tpu_custom_call.1']
    %14 = vsyncpa [#allocation4], 0
    %15 = vsyncpa [#allocation7], 0
    %16 = vsyncpa [#allocation10], 0
    %17 = vsyncpa [#allocation5], 0
    %s18 = scalar_lea.sflag [#allocation5], 1
    %19 = vsyncpa %s18, 0
    %20 = vsyncpa [#allocation13], 0
    loop: start=0, step=1, limit=4
    $region2: #{tpu_custom_call.1} parent=1 // loop_pre_header
      _
    $region3: #{tpu_custom_call.1} parent=1 // loop_header
      %s22 = sphi 0, %s26
      %p23 = scmp.ge.s32.totalorder %s22, 4
      %s30 = sphi 0, %s30
      %s32 = sphi 0, %s30
      %s33 = sphi 0, %s32
      %s47 = sphi 0, %s33
      %s51 = sphi 0, %s51
      %s53 = sphi 0, %s51
      %s54 = sphi 0, %s53
      %s68 = sphi 0, %s54
      %s72 = sphi 0, %s72
      %s74 = sphi 0, %s72
      %s75 = sphi 0, %s74
      %s89 = sphi 0, %s75
      %s93 = sphi 0, %s93
      %s95 = sphi 0, %s93
      %s96 = sphi 0, %s95
      %s110 = sphi 0, %s96
      %s114 = sphi 0, %s114
      %s116 = sphi 0, %s114
      %s117 = sphi 0, %s116
      %s131 = sphi 0, %s117
      %s137 = sphi 0, %s139
      %s140 = sphi 0, %s137
      %s141 = sphi 0, %s140
      %s157 = sphi 0, %s141
      %s163 = sphi 0, %s165
      %s166 = sphi 0, %s163
      %s167 = sphi 0, %s166
      %s183 = sphi 0, %s167
      %s189 = sphi 0, %s191
      %s192 = sphi 0, %s189
      %s193 = sphi 0, %s192
      %s209 = sphi 0, %s193
      %s213 = sphi 0, %s213
      %s215 = sphi 0, %s213
      %s216 = sphi 0, %s215
      %s230 = sphi 0, %s216
    $region4: #{tpu_custom_call.1} parent=1 // loop_header_branch
      %25 = sbr.rel (%p23) target = $region8
    $region5: #{tpu_custom_call.1} parent=1 // loop_body
      %s27 = ssub.s32 %s22, 1
      %s28 = ssub.s32 %s22, 2
      %s29 = sadd.s32 %s22, 1
      %s31 = sadd.s32 %s30, 1
      %p34 = scmp.eq.s32.totalorder %s22, 1
      %p35 = scmp.ne.s32.totalorder %s30, %s32
      %p36 = scmp.eq.s32.totalorder %s22, 0
      %p37 = por %p35, %p36
      %p38 = scmp.ne.s32.totalorder %s30, %s32
      %p39 = scmp.eq.s32.totalorder %s27, 1
      %p40 = por %p38, %p39
      %p41 = scmp.ne.s32.totalorder %s32, %s33
      %p42 = scmp.eq.s32.totalorder %s27, 0
      %p43 = por %p41, %p42
      %p44 = scmp.ne.s32.totalorder %s32, %s33
      %p45 = scmp.eq.s32.totalorder %s28, 1
      %p46 = por %p44, %p45
      %p48 = scmp.ne.s32.totalorder %s33, %s47
      %p49 = scmp.eq.s32.totalorder %s28, 0
      %p50 = por %p48, %p49
      %s52 = sadd.s32 %s51, 1
      %p55 = scmp.eq.s32.totalorder %s22, 1
      %p56 = scmp.ne.s32.totalorder %s51, %s53
      %p57 = scmp.eq.s32.totalorder %s22, 0
      %p58 = por %p56, %p57
      %p59 = scmp.ne.s32.totalorder %s51, %s53
      %p60 = scmp.eq.s32.totalorder %s27, 1
      %p61 = por %p59, %p60
      %p62 = scmp.ne.s32.totalorder %s53, %s54
      %p63 = scmp.eq.s32.totalorder %s27, 0
      %p64 = por %p62, %p63
      %p65 = scmp.ne.s32.totalorder %s53, %s54
      %p66 = scmp.eq.s32.totalorder %s28, 1
      %p67 = por %p65, %p66
      %p69 = scmp.ne.s32.totalorder %s54, %s68
      %p70 = scmp.eq.s32.totalorder %s28, 0
      %p71 = por %p69, %p70
      %s73 = sadd.s32 %s72, 1
      %p76 = scmp.eq.s32.totalorder %s22, 1
      %p77 = scmp.ne.s32.totalorder %s72, %s74
      %p78 = scmp.eq.s32.totalorder %s22, 0
      %p79 = por %p77, %p78
      %p80 = scmp.ne.s32.totalorder %s72, %s74
      %p81 = scmp.eq.s32.totalorder %s27, 1
      %p82 = por %p80, %p81
      %p83 = scmp.ne.s32.totalorder %s74, %s75
      %p84 = scmp.eq.s32.totalorder %s27, 0
      %p85 = por %p83, %p84
      %p86 = scmp.ne.s32.totalorder %s74, %s75
      %p87 = scmp.eq.s32.totalorder %s28, 1
      %p88 = por %p86, %p87
      %p90 = scmp.ne.s32.totalorder %s75, %s89
      %p91 = scmp.eq.s32.totalorder %s28, 0
      %p92 = por %p90, %p91
      %s94 = sadd.s32 %s93, 1
      %p97 = scmp.eq.s32.totalorder %s22, 1
      %p98 = scmp.ne.s32.totalorder %s93, %s95
      %p99 = scmp.eq.s32.totalorder %s22, 0
      %p100 = por %p98, %p99
      %p101 = scmp.ne.s32.totalorder %s93, %s95
      %p102 = scmp.eq.s32.totalorder %s27, 1
      %p103 = por %p101, %p102
      %p104 = scmp.ne.s32.totalorder %s95, %s96
      %p105 = scmp.eq.s32.totalorder %s27, 0
      %p106 = por %p104, %p105
      %p107 = scmp.ne.s32.totalorder %s95, %s96
      %p108 = scmp.eq.s32.totalorder %s28, 1
      %p109 = por %p107, %p108
      %p111 = scmp.ne.s32.totalorder %s96, %s110
      %p112 = scmp.eq.s32.totalorder %s28, 0
      %p113 = por %p111, %p112
      %s115 = sadd.s32 %s114, 1
      %p118 = scmp.eq.s32.totalorder %s22, 1
      %p119 = scmp.ne.s32.totalorder %s114, %s116
      %p120 = scmp.eq.s32.totalorder %s22, 0
      %p121 = por %p119, %p120
      %p122 = scmp.ne.s32.totalorder %s114, %s116
      %p123 = scmp.eq.s32.totalorder %s27, 1
      %p124 = por %p122, %p123
      %p125 = scmp.ne.s32.totalorder %s116, %s117
      %p126 = scmp.eq.s32.totalorder %s27, 0
      %p127 = por %p125, %p126
      %p128 = scmp.ne.s32.totalorder %s116, %s117
      %p129 = scmp.eq.s32.totalorder %s28, 1
      %p130 = por %p128, %p129
      %p132 = scmp.ne.s32.totalorder %s117, %s131
      %p133 = scmp.eq.s32.totalorder %s28, 0
      %p134 = por %p132, %p133
      %s135 = ssub.s32 %s22, %s29
      %p136 = scmp.eq.s32.totalorder %s135, 0
      %s138 = sadd.s32 %s137, 1
      %s139 = scalar_select %p136, %s137, %s138
      %p142 = pneg %p136
      %p143 = scmp.eq.s32.totalorder %s22, 1
      %p144 = por %p142, %p143
      %p145 = scmp.ne.s32.totalorder %s137, %s140
      %p146 = scmp.eq.s32.totalorder %s22, 0
      %p147 = por %p145, %p146
      %p148 = scmp.ne.s32.totalorder %s137, %s140
      %p149 = scmp.eq.s32.totalorder %s27, 1
      %p150 = por %p148, %p149
      %p151 = scmp.ne.s32.totalorder %s140, %s141
      %p152 = scmp.eq.s32.totalorder %s27, 0
      %p153 = por %p151, %p152
      %p154 = scmp.ne.s32.totalorder %s140, %s141
      %p155 = scmp.eq.s32.totalorder %s28, 1
      %p156 = por %p154, %p155
      %p158 = scmp.ne.s32.totalorder %s141, %s157
      %p159 = scmp.eq.s32.totalorder %s28, 0
      %p160 = por %p158, %p159
      %s161 = ssub.s32 %s22, %s29
      %p162 = scmp.eq.s32.totalorder %s161, 0
      %s164 = sadd.s32 %s163, 1
      %s165 = scalar_select %p162, %s163, %s164
      %p168 = pneg %p162
      %p169 = scmp.eq.s32.totalorder %s22, 1
      %p170 = por %p168, %p169
      %p171 = scmp.ne.s32.totalorder %s163, %s166
      %p172 = scmp.eq.s32.totalorder %s22, 0
      %p173 = por %p171, %p172
      %p174 = scmp.ne.s32.totalorder %s163, %s166
      %p175 = scmp.eq.s32.totalorder %s27, 1
      %p176 = por %p174, %p175
      %p177 = scmp.ne.s32.totalorder %s166, %s167
      %p178 = scmp.eq.s32.totalorder %s27, 0
      %p179 = por %p177, %p178
      %p180 = scmp.ne.s32.totalorder %s166, %s167
      %p181 = scmp.eq.s32.totalorder %s28, 1
      %p182 = por %p180, %p181
      %p184 = scmp.ne.s32.totalorder %s167, %s183
      %p185 = scmp.eq.s32.totalorder %s28, 0
      %p186 = por %p184, %p185
      %s187 = ssub.s32 %s22, %s29
      %p188 = scmp.eq.s32.totalorder %s187, 0
      %s190 = sadd.s32 %s189, 1
      %s191 = scalar_select %p188, %s189, %s190
      %p194 = pneg %p188
      %p195 = scmp.eq.s32.totalorder %s22, 1
      %p196 = por %p194, %p195
      %p197 = scmp.ne.s32.totalorder %s189, %s192
      %p198 = scmp.eq.s32.totalorder %s22, 0
      %p199 = por %p197, %p198
      %p200 = scmp.ne.s32.totalorder %s189, %s192
      %p201 = scmp.eq.s32.totalorder %s27, 1
      %p202 = por %p200, %p201
      %p203 = scmp.ne.s32.totalorder %s192, %s193
      %p204 = scmp.eq.s32.totalorder %s27, 0
      %p205 = por %p203, %p204
      %p206 = scmp.ne.s32.totalorder %s192, %s193
      %p207 = scmp.eq.s32.totalorder %s28, 1
      %p208 = por %p206, %p207
      %p210 = scmp.ne.s32.totalorder %s193, %s209
      %p211 = scmp.eq.s32.totalorder %s28, 0
      %p212 = por %p210, %p211
      %s214 = sadd.s32 %s213, 1
      %p217 = scmp.eq.s32.totalorder %s22, 1
      %p218 = scmp.ne.s32.totalorder %s213, %s215
      %p219 = scmp.eq.s32.totalorder %s22, 0
      %p220 = por %p218, %p219
      %p221 = scmp.ne.s32.totalorder %s213, %s215
      %p222 = scmp.eq.s32.totalorder %s27, 1
      %p223 = por %p221, %p222
      %p224 = scmp.ne.s32.totalorder %s215, %s216
      %p225 = scmp.eq.s32.totalorder %s27, 0
      %p226 = por %p224, %p225
      %p227 = scmp.ne.s32.totalorder %s215, %s216
      %p228 = scmp.eq.s32.totalorder %s28, 1
      %p229 = por %p227, %p228
      %p231 = scmp.ne.s32.totalorder %s216, %s230
      %p232 = scmp.eq.s32.totalorder %s28, 0
      %p233 = por %p231, %p232
      %p234 = scmp.le.s32.totalorder 1, %s22
      %p235 = scmp.lt.s32.totalorder %s22, 3
      %p236 = pnand %p234, %p235
      %p237 = pneg %p236
      // Predicated region
      $region9: #{tpu_custom_call.1} parent=5 // pred_check
        _
      $region10: #{tpu_custom_call.1} parent=5 // pred_check_branch
        %239 = sbr.rel (%p236) target = $region12
      $region11: #{tpu_custom_call.1} parent=5 // pred_region
        %s240 = ssub.s32 %s22, 1
        // Predicated region
        $region13: #{tpu_custom_call.1} parent=11 // pred_check
          %p241 = pneg %p43
        $region14: #{tpu_custom_call.1} parent=11 // pred_check_branch
          %243 = sbr.rel (%p241) target = $region16
        $region15: #{tpu_custom_call.1} parent=11 // pred_region
          %245 = vsyncadd [#allocation4], 0
          %s246 = sshll.u32 %s0, 4
          %s247 = int_to_ptr.hbm [resolvable:$true] %s246
          %s248 = sshll.u32 [#allocation3], 4
          %s249 = int_to_ptr.vmem [resolvable:$true] %s248
          %254 = dma.hbm_to_vmem [thread:$0]  %s247, 2048, %s249, [#allocation4], 128, 128, 8
        $region16: #{tpu_custom_call.1} parent=11 // pred_fallthru
          _
        // Predicated region
        $region17: #{tpu_custom_call.1} parent=11 // pred_check
          %p255 = pneg %p64
        $region18: #{tpu_custom_call.1} parent=11 // pred_check_branch
          %257 = sbr.rel (%p255) target = $region20
        $region19: #{tpu_custom_call.1} parent=11 // pred_region
          %259 = vsyncadd [#allocation7], 0
          %s260 = sshll.u32 %s1, 4
          %s261 = int_to_ptr.hbm [resolvable:$true] %s260
          %s262 = sshll.u32 [#allocation6], 4
          %s263 = int_to_ptr.vmem [resolvable:$true] %s262
          %268 = dma.hbm_to_vmem [thread:$0]  %s261, 6144, %s263, [#allocation7], 384, 384, 24
        $region20: #{tpu_custom_call.1} parent=11 // pred_fallthru
          _
        // Predicated region
        $region21: #{tpu_custom_call.1} parent=11 // pred_check
          %p269 = pneg %p85
        $region22: #{tpu_custom_call.1} parent=11 // pred_check_branch
          %271 = sbr.rel (%p269) target = $region24
        $region23: #{tpu_custom_call.1} parent=11 // pred_region
          %273 = vsyncadd [#allocation7], 0
          %s274 = sshll.u32 %s2, 4
          %s275 = int_to_ptr.hbm [resolvable:$true] %s274
          %s276 = sshll.u32 [#allocation8], 4
          %s277 = int_to_ptr.vmem [resolvable:$true] %s276
          %282 = dma.hbm_to_vmem [thread:$0]  %s275, 6144, %s277, [#allocation7], 384, 384, 24
        $region24: #{tpu_custom_call.1} parent=11 // pred_fallthru
          _
        // Predicated region
        $region25: #{tpu_custom_call.1} parent=11 // pred_check
          %p283 = pneg %p106
        $region26: #{tpu_custom_call.1} parent=11 // pred_check_branch
          %285 = sbr.rel (%p283) target = $region28
        $region27: #{tpu_custom_call.1} parent=11 // pred_region
          _
        $region28: #{tpu_custom_call.1} parent=11 // pred_fallthru
          _
        // Predicated region
        $region29: #{tpu_custom_call.1} parent=11 // pred_check
          %p286 = pneg %p127
        $region30: #{tpu_custom_call.1} parent=11 // pred_check_branch
          %288 = sbr.rel (%p286) target = $region32
        $region31: #{tpu_custom_call.1} parent=11 // pred_region
          %290 = vsyncadd [#allocation10], 0
          %s292 = sshll.u32 %s4, 4
          %s293 = int_to_ptr.hbm [resolvable:$true] %s292
          %s294 = sshll.u32 [#allocation9], 4
          %s295 = int_to_ptr.vmem [resolvable:$true] %s294
          %297 = dma.hbm_to_vmem [thread:$0]  %s293, 48, %s295, [#allocation10]
        $region32: #{tpu_custom_call.1} parent=11 // pred_fallthru
          _
      $region12: #{tpu_custom_call.1} parent=5 // pred_fallthru
        _
      %p298 = scmp.lt.s32.totalorder %s22, 2
      // Predicated region
      $region33: #{tpu_custom_call.1} parent=5 // pred_check
        %p299 = pneg %p298
      $region34: #{tpu_custom_call.1} parent=5 // pred_check_branch
        %301 = sbr.rel (%p299) target = $region36
      $region35: #{tpu_custom_call.1} parent=5 // pred_region
        // Predicated region
        $region37: #{tpu_custom_call.1} parent=35 // pred_check
          %p302 = pneg %p147
        $region38: #{tpu_custom_call.1} parent=35 // pred_check_branch
          %304 = sbr.rel (%p302) target = $region40
        $region39: #{tpu_custom_call.1} parent=35 // pred_region
          %s305 = smul.u32 16, %s22
          %p306 = scmp.lt.s32.totalorder %s305, 31
          %s307 = scalar_select %p306, %s305, 31
          %s308 = smul.addr %s307, 8
          %s309 = scalar_lea.vmem %s5, %s308
          %s310 = smul.u32 16, %s22
        $region40: #{tpu_custom_call.1} parent=35 // pred_fallthru
          _
        // Predicated region
        $region41: #{tpu_custom_call.1} parent=35 // pred_check
          %p311 = pneg %p173
        $region42: #{tpu_custom_call.1} parent=35 // pred_check_branch
          %313 = sbr.rel (%p311) target = $region44
        $region43: #{tpu_custom_call.1} parent=35 // pred_region
          %s314 = smul.u32 16, %s22
          %p315 = scmp.lt.s32.totalorder %s314, 31
          %s316 = scalar_select %p315, %s314, 31
          %s317 = smul.addr %s316, 8
          %s318 = scalar_lea.vmem %s6, %s317
          %s319 = smul.u32 16, %s22
        $region44: #{tpu_custom_call.1} parent=35 // pred_fallthru
          _
      $region36: #{tpu_custom_call.1} parent=5 // pred_fallthru
        _
      %p320 = scmp.le.s32.totalorder 1, %s22
      %p321 = scmp.lt.s32.totalorder %s22, 3
      %p322 = pnand %p320, %p321
      %p323 = pneg %p322
      // Predicated region
      $region45: #{tpu_custom_call.1} parent=5 // pred_check
        _
      $region46: #{tpu_custom_call.1} parent=5 // pred_check_branch
        %325 = sbr.rel (%p322) target = $region48
      $region47: #{tpu_custom_call.1} parent=5 // pred_region
        %s326 = ssub.s32 %s22, 1
        // Predicated region
        $region49: #{tpu_custom_call.1} parent=47 // pred_check
          %p327 = pneg %p43
        $region50: #{tpu_custom_call.1} parent=47 // pred_check_branch
          %329 = sbr.rel (%p327) target = $region52
        $region51: #{tpu_custom_call.1} parent=47 // pred_region
          %331 = dma.done [#allocation4], 2048
        $region52: #{tpu_custom_call.1} parent=47 // pred_fallthru
          _
        // Predicated region
        $region53: #{tpu_custom_call.1} parent=47 // pred_check
          %p332 = pneg %p64
        $region54: #{tpu_custom_call.1} parent=47 // pred_check_branch
          %334 = sbr.rel (%p332) target = $region56
        $region55: #{tpu_custom_call.1} parent=47 // pred_region
          %336 = dma.done [#allocation7], 6144
        $region56: #{tpu_custom_call.1} parent=47 // pred_fallthru
          _
        // Predicated region
        $region57: #{tpu_custom_call.1} parent=47 // pred_check
          %p337 = pneg %p85
        $region58: #{tpu_custom_call.1} parent=47 // pred_check_branch
          %339 = sbr.rel (%p337) target = $region60
        $region59: #{tpu_custom_call.1} parent=47 // pred_region
          %341 = dma.done [#allocation7], 6144
        $region60: #{tpu_custom_call.1} parent=47 // pred_fallthru
          _
        // Predicated region
        $region61: #{tpu_custom_call.1} parent=47 // pred_check
          %p342 = pneg %p127
        $region62: #{tpu_custom_call.1} parent=47 // pred_check_branch
          %344 = sbr.rel (%p342) target = $region64
        $region63: #{tpu_custom_call.1} parent=47 // pred_region
          %346 = dma.done [#allocation10], 48
        $region64: #{tpu_custom_call.1} parent=47 // pred_fallthru
          _
        %p347 = pneg %p43
        %p348 = pneg %p40
        %p349 = pneg %p64
        %p350 = pneg %p61
        %p351 = pneg %p85
        %p352 = pneg %p82
        %p353 = pneg %p106
        %p354 = pneg %p103
        %p355 = pneg %p127
        %p356 = pneg %p124
        %s357 = smul.u32 16, %s27
        %p358 = scmp.lt.s32.totalorder %s357, 31
        %s359 = scalar_select %p358, %s357, 31
        %s360 = smul.addr %s359, 8
        %s361 = scalar_lea.vmem %s5, %s360
        %p362 = pneg %p153
        %p363 = pneg %p150
        %s364 = smul.u32 16, %s27
        %p365 = scmp.lt.s32.totalorder %s364, 31
        %s366 = scalar_select %p365, %s364, 31
        %s367 = smul.addr %s366, 8
        %s368 = scalar_lea.vmem %s6, %s367
        %p369 = pneg %p179
        %p370 = pneg %p176
        %p371 = pneg %p205
        %p372 = pneg %p202
        %s373 = sand.u32 %s192, 1
        %s374 = scalar_lea.sflag [#allocation5], %s373
        %s375 = sand.u32 %s192, 1
        %s376 = smul.addr %s375, 64
        %s377 = scalar_lea.vmem [#allocation11], %s376
        %p378 = pneg %p226
        %p379 = pneg %p223
        %s380 = smul.u32 16, %s27
        %p381 = scmp.lt.s32.totalorder %s380, 31
        %s382 = scalar_select %p381, %s380, 31
        %s383 = smul.addr %s382, 8
        %s384 = scalar_lea.vmem %s5, %s383
        %s385 = smul.u32 16, %s27
        %s386 = smul.u32 16, %s27
        %p387 = scmp.lt.s32.totalorder %s386, 31
        %s388 = scalar_select %p387, %s386, 31
        %s389 = smul.addr %s388, 8
        %s390 = scalar_lea.vmem %s6, %s389
        %s391 = smul.u32 16, %s27
        %s392 = smul.u32 16, %s27
        %p393 = scmp.eq.s32.totalorder %s27, 0
        // Predicated region
        $region65: #{tpu_custom_call.1} parent=47 // pred_check
          %p394 = pneg %p393
        $region66: #{tpu_custom_call.1} parent=47 // pred_check_branch
          %396 = sbr.rel (%p394) target = $region68
        $region67: #{tpu_custom_call.1} parent=47 // pred_region
          %v397 = vld [vmem:[#allocation3] sm:$0xff]
          %v398 = vld [vmem:[#allocation3 + $0x8] sm:$0xff]
          %v399 = vld [vmem:[#allocation3 + $0x10] sm:$0xff]
          %v400 = vld [vmem:[#allocation3 + $0x18] sm:$0xff]
          %v401 = vld [vmem:[#allocation3 + $0x20] sm:$0xff]
          %v402 = vld [vmem:[#allocation3 + $0x28] sm:$0xff]
          %v403 = vld [vmem:[#allocation3 + $0x30] sm:$0xff]
          %v404 = vld [vmem:[#allocation3 + $0x38] sm:$0xff]
          %v405 = vld [vmem:[#allocation3 + $0x40] sm:$0xff]
          %v406 = vld [vmem:[#allocation3 + $0x48] sm:$0xff]
          %v407 = vld [vmem:[#allocation3 + $0x50] sm:$0xff]
          %v408 = vld [vmem:[#allocation3 + $0x58] sm:$0xff]
          %v409 = vld [vmem:[#allocation3 + $0x60] sm:$0xff]
          %v410 = vld [vmem:[#allocation3 + $0x68] sm:$0xff]
          %v411 = vld [vmem:[#allocation3 + $0x70] sm:$0xff]
          %v412 = vld [vmem:[#allocation3 + $0x78] sm:$0xff]
          %v413 = vld [vmem:[#allocation6] sm:$0xff]
          %v414 = vld [vmem:[#allocation6 + $0x8] sm:$0xff]
          %v415 = vld [vmem:[#allocation6 + $0x10] sm:$0xff]
          %v416 = vld [vmem:[#allocation6 + $0x18] sm:$0xff]
          %v417 = vld [vmem:[#allocation6 + $0x20] sm:$0xff]
          %v418 = vld [vmem:[#allocation6 + $0x28] sm:$0xff]
          %v419 = vld [vmem:[#allocation6 + $0x30] sm:$0xff]
          %v420 = vld [vmem:[#allocation6 + $0x38] sm:$0xff]
          %v421 = vld [vmem:[#allocation6 + $0x40] sm:$0xff]
          %v422 = vld [vmem:[#allocation6 + $0x48] sm:$0xff]
          %v423 = vld [vmem:[#allocation6 + $0x50] sm:$0xff]
          %v424 = vld [vmem:[#allocation6 + $0x58] sm:$0xff]
          %v425 = vld [vmem:[#allocation6 + $0x60] sm:$0xff]
          %v426 = vld [vmem:[#allocation6 + $0x68] sm:$0xff]
          %v427 = vld [vmem:[#allocation6 + $0x70] sm:$0xff]
          %v428 = vld [vmem:[#allocation6 + $0x78] sm:$0xff]
          %v429 = vld [vmem:[#allocation6 + $0x80] sm:$0xff]
          %v430 = vld [vmem:[#allocation6 + $0x88] sm:$0xff]
          %v431 = vld [vmem:[#allocation6 + $0x90] sm:$0xff]
          %v432 = vld [vmem:[#allocation6 + $0x98] sm:$0xff]
          %v433 = vld [vmem:[#allocation6 + $0xa0] sm:$0xff]
          %v434 = vld [vmem:[#allocation6 + $0xa8] sm:$0xff]
          %v435 = vld [vmem:[#allocation6 + $0xb0] sm:$0xff]
          %v436 = vld [vmem:[#allocation6 + $0xb8] sm:$0xff]
          %v437 = vld [vmem:[#allocation6 + $0xc0] sm:$0xff]
          %v438 = vld [vmem:[#allocation6 + $0xc8] sm:$0xff]
          %v439 = vld [vmem:[#allocation6 + $0xd0] sm:$0xff]
          %v440 = vld [vmem:[#allocation6 + $0xd8] sm:$0xff]
          %v441 = vld [vmem:[#allocation6 + $0xe0] sm:$0xff]
          %v442 = vld [vmem:[#allocation6 + $0xe8] sm:$0xff]
          %v443 = vld [vmem:[#allocation6 + $0xf0] sm:$0xff]
          %v444 = vld [vmem:[#allocation6 + $0xf8] sm:$0xff]
          %v445 = vld [vmem:[#allocation6 + $0x100] sm:$0xff]
          %v446 = vld [vmem:[#allocation6 + $0x108] sm:$0xff]
          %v447 = vld [vmem:[#allocation6 + $0x110] sm:$0xff]
          %v448 = vld [vmem:[#allocation6 + $0x118] sm:$0xff]
          %v449 = vld [vmem:[#allocation6 + $0x120] sm:$0xff]
          %v450 = vld [vmem:[#allocation6 + $0x128] sm:$0xff]
          %v451 = vld [vmem:[#allocation6 + $0x130] sm:$0xff]
          %v452 = vld [vmem:[#allocation6 + $0x138] sm:$0xff]
          %v453 = vld [vmem:[#allocation6 + $0x140] sm:$0xff]
          %v454 = vld [vmem:[#allocation6 + $0x148] sm:$0xff]
          %v455 = vld [vmem:[#allocation6 + $0x150] sm:$0xff]
          %v456 = vld [vmem:[#allocation6 + $0x158] sm:$0xff]
          %v457 = vld [vmem:[#allocation6 + $0x160] sm:$0xff]
          %v458 = vld [vmem:[#allocation6 + $0x168] sm:$0xff]
          %v459 = vld [vmem:[#allocation6 + $0x170] sm:$0xff]
          %v460 = vld [vmem:[#allocation6 + $0x178] sm:$0xff]
          %v461 = vld [vmem:[%s3] sm:$0x7]
          %v463 = vperm.slane %v461, 0
          %v464 = vperm.slane %v461, 1
          %v465 = vperm.slane %v461, 2
          %469 = vmatpush.msra.mxu0 %v458
          %470 = vmatpush.msra.mxu0 %v455
          %471 = vmatpush.msra.mxu0 %v452
          %472 = vmatpush.msra.mxu0 %v449
          %473 = vmatpush.msra.mxu0 %v446
          %474 = vmatpush.msra.mxu0 %v443
          %475 = vmatpush.msra.mxu0 %v440
          %476 = vmatpush.msra.mxu0 %v437
          %477 = vmatpush.msra.mxu0 %v434
          %478 = vmatpush.msra.mxu0 %v431
          %479 = vmatpush.msra.mxu0 %v428
          %480 = vmatpush.msra.mxu0 %v425
          %481 = vmatpush.msra.mxu0 %v422
          %482 = vmatpush.msra.mxu0 %v419
          %483 = vmatpush.msra.mxu0 %v416
          %484 = vmatpush.msra.mxu0 %v413
          %485 = vmatmul.f32.gmra.mxu0 %v397
          %v486 = vpop.f32.mrf.mxu0
          %v487 = vadd.f32 %v463, %v486
          %488 = vmatmul.f32.gmra.mxu0 %v398
          %v489 = vpop.f32.mrf.mxu0
          %v490 = vadd.f32 %v463, %v489
          %491 = vmatmul.f32.gmra.mxu0 %v399
          %v492 = vpop.f32.mrf.mxu0
          %v493 = vadd.f32 %v463, %v492
          %494 = vmatmul.f32.gmra.mxu0 %v400
          %v495 = vpop.f32.mrf.mxu0
          %v496 = vadd.f32 %v463, %v495
          %497 = vmatmul.f32.gmra.mxu0 %v401
          %v498 = vpop.f32.mrf.mxu0
          %v499 = vadd.f32 %v463, %v498
          %500 = vmatmul.f32.gmra.mxu0 %v402
          %v501 = vpop.f32.mrf.mxu0
          %v502 = vadd.f32 %v463, %v501
          %503 = vmatmul.f32.gmra.mxu0 %v403
          %v504 = vpop.f32.mrf.mxu0
          %v505 = vadd.f32 %v463, %v504
          %506 = vmatmul.f32.gmra.mxu0 %v404
          %v507 = vpop.f32.mrf.mxu0
          %v508 = vadd.f32 %v463, %v507
          %509 = vmatmul.f32.gmra.mxu0 %v405
          %v510 = vpop.f32.mrf.mxu0
          %v511 = vadd.f32 %v463, %v510
          %512 = vmatmul.f32.gmra.mxu0 %v406
          %v513 = vpop.f32.mrf.mxu0
          %v514 = vadd.f32 %v463, %v513
          %515 = vmatmul.f32.gmra.mxu0 %v407
          %v516 = vpop.f32.mrf.mxu0
          %v517 = vadd.f32 %v463, %v516
          %518 = vmatmul.f32.gmra.mxu0 %v408
          %v519 = vpop.f32.mrf.mxu0
          %v520 = vadd.f32 %v463, %v519
          %521 = vmatmul.f32.gmra.mxu0 %v409
          %v522 = vpop.f32.mrf.mxu0
          %v523 = vadd.f32 %v463, %v522
          %524 = vmatmul.f32.gmra.mxu0 %v410
          %v525 = vpop.f32.mrf.mxu0
          %v526 = vadd.f32 %v463, %v525
          %527 = vmatmul.f32.gmra.mxu0 %v411
          %v528 = vpop.f32.mrf.mxu0
          %v529 = vadd.f32 %v463, %v528
          %530 = vmatmul.f32.gmra.mxu0 %v412
          %v531 = vpop.f32.mrf.mxu0
          %v532 = vadd.f32 %v463, %v531
          %533 = vdwg.mxu0
          %534 = vmatpush.msra.mxu0 %v459
          %535 = vmatpush.msra.mxu0 %v456
          %536 = vmatpush.msra.mxu0 %v453
          %537 = vmatpush.msra.mxu0 %v450
          %538 = vmatpush.msra.mxu0 %v447
          %539 = vmatpush.msra.mxu0 %v444
          %540 = vmatpush.msra.mxu0 %v441
          %541 = vmatpush.msra.mxu0 %v438
          %542 = vmatpush.msra.mxu0 %v435
          %543 = vmatpush.msra.mxu0 %v432
          %544 = vmatpush.msra.mxu0 %v429
          %545 = vmatpush.msra.mxu0 %v426
          %546 = vmatpush.msra.mxu0 %v423
          %547 = vmatpush.msra.mxu0 %v420
          %548 = vmatpush.msra.mxu0 %v417
          %549 = vmatpush.msra.mxu0 %v414
          %550 = vmatmul.f32.gmra.mxu0 %v397
          %v551 = vpop.f32.mrf.mxu0
          %v552 = vadd.f32 %v464, %v551
          %553 = vmatmul.f32.gmra.mxu0 %v398
          %v554 = vpop.f32.mrf.mxu0
          %v555 = vadd.f32 %v464, %v554
          %556 = vmatmul.f32.gmra.mxu0 %v399
          %v557 = vpop.f32.mrf.mxu0
          %v558 = vadd.f32 %v464, %v557
          %559 = vmatmul.f32.gmra.mxu0 %v400
          %v560 = vpop.f32.mrf.mxu0
          %v561 = vadd.f32 %v464, %v560
          %562 = vmatmul.f32.gmra.mxu0 %v401
          %v563 = vpop.f32.mrf.mxu0
          %v564 = vadd.f32 %v464, %v563
          %565 = vmatmul.f32.gmra.mxu0 %v402
          %v566 = vpop.f32.mrf.mxu0
          %v567 = vadd.f32 %v464, %v566
          %568 = vmatmul.f32.gmra.mxu0 %v403
          %v569 = vpop.f32.mrf.mxu0
          %v570 = vadd.f32 %v464, %v569
          %571 = vmatmul.f32.gmra.mxu0 %v404
          %v572 = vpop.f32.mrf.mxu0
          %v573 = vadd.f32 %v464, %v572
          %574 = vmatmul.f32.gmra.mxu0 %v405
          %v575 = vpop.f32.mrf.mxu0
          %v576 = vadd.f32 %v464, %v575
          %577 = vmatmul.f32.gmra.mxu0 %v406
          %v578 = vpop.f32.mrf.mxu0
          %v579 = vadd.f32 %v464, %v578
          %580 = vmatmul.f32.gmra.mxu0 %v407
          %v581 = vpop.f32.mrf.mxu0
          %v582 = vadd.f32 %v464, %v581
          %583 = vmatmul.f32.gmra.mxu0 %v408
          %v584 = vpop.f32.mrf.mxu0
          %v585 = vadd.f32 %v464, %v584
          %586 = vmatmul.f32.gmra.mxu0 %v409
          %v587 = vpop.f32.mrf.mxu0
          %v588 = vadd.f32 %v464, %v587
          %589 = vmatmul.f32.gmra.mxu0 %v410
          %v590 = vpop.f32.mrf.mxu0
          %v591 = vadd.f32 %v464, %v590
          %592 = vmatmul.f32.gmra.mxu0 %v411
          %v593 = vpop.f32.mrf.mxu0
          %v594 = vadd.f32 %v464, %v593
          %595 = vmatmul.f32.gmra.mxu0 %v412
          %v596 = vpop.f32.mrf.mxu0
          %v597 = vadd.f32 %v464, %v596
          %598 = vdwg.mxu0
          %599 = vmatpush.msra.mxu0 %v460
          %600 = vmatpush.msra.mxu0 %v457
          %601 = vmatpush.msra.mxu0 %v454
          %602 = vmatpush.msra.mxu0 %v451
          %603 = vmatpush.msra.mxu0 %v448
          %604 = vmatpush.msra.mxu0 %v445
          %605 = vmatpush.msra.mxu0 %v442
          %606 = vmatpush.msra.mxu0 %v439
          %607 = vmatpush.msra.mxu0 %v436
          %608 = vmatpush.msra.mxu0 %v433
          %609 = vmatpush.msra.mxu0 %v430
          %610 = vmatpush.msra.mxu0 %v427
          %611 = vmatpush.msra.mxu0 %v424
          %612 = vmatpush.msra.mxu0 %v421
          %613 = vmatpush.msra.mxu0 %v418
          %614 = vmatpush.msra.mxu0 %v415
          %615 = vmatmul.f32.gmra.mxu0 %v397
          %v616 = vpop.f32.mrf.mxu0
          %v617 = vadd.f32 %v465, %v616
          %618 = vmatmul.f32.gmra.mxu0 %v398
          %v619 = vpop.f32.mrf.mxu0
          %v620 = vadd.f32 %v465, %v619
          %621 = vmatmul.f32.gmra.mxu0 %v399
          %v622 = vpop.f32.mrf.mxu0
          %v623 = vadd.f32 %v465, %v622
          %624 = vmatmul.f32.gmra.mxu0 %v400
          %v625 = vpop.f32.mrf.mxu0
          %v626 = vadd.f32 %v465, %v625
          %627 = vmatmul.f32.gmra.mxu0 %v401
          %v628 = vpop.f32.mrf.mxu0
          %v629 = vadd.f32 %v465, %v628
          %630 = vmatmul.f32.gmra.mxu0 %v402
          %v631 = vpop.f32.mrf.mxu0
          %v632 = vadd.f32 %v465, %v631
          %633 = vmatmul.f32.gmra.mxu0 %v403
          %v634 = vpop.f32.mrf.mxu0
          %v635 = vadd.f32 %v465, %v634
          %636 = vmatmul.f32.gmra.mxu0 %v404
          %v637 = vpop.f32.mrf.mxu0
          %v638 = vadd.f32 %v465, %v637
          %639 = vmatmul.f32.gmra.mxu0 %v405
          %v640 = vpop.f32.mrf.mxu0
          %v641 = vadd.f32 %v465, %v640
          %642 = vmatmul.f32.gmra.mxu0 %v406
          %v643 = vpop.f32.mrf.mxu0
          %v644 = vadd.f32 %v465, %v643
          %645 = vmatmul.f32.gmra.mxu0 %v407
          %v646 = vpop.f32.mrf.mxu0
          %v647 = vadd.f32 %v465, %v646
          %648 = vmatmul.f32.gmra.mxu0 %v408
          %v649 = vpop.f32.mrf.mxu0
          %v650 = vadd.f32 %v465, %v649
          %651 = vmatmul.f32.gmra.mxu0 %v409
          %v652 = vpop.f32.mrf.mxu0
          %v653 = vadd.f32 %v465, %v652
          %654 = vmatmul.f32.gmra.mxu0 %v410
          %v655 = vpop.f32.mrf.mxu0
          %v656 = vadd.f32 %v465, %v655
          %657 = vmatmul.f32.gmra.mxu0 %v411
          %v658 = vpop.f32.mrf.mxu0
          %v659 = vadd.f32 %v465, %v658
          %660 = vmatmul.f32.gmra.mxu0 %v412
          %v661 = vpop.f32.mrf.mxu0
          %v662 = vadd.f32 %v465, %v661
          %663 = vdwg.mxu0
          %v664 = vld [vmem:[#allocation8] sm:$0xff]
          %v665 = vld [vmem:[#allocation8 + $0x8] sm:$0xff]
          %v666 = vld [vmem:[#allocation8 + $0x10] sm:$0xff]
          %v667 = vld [vmem:[#allocation8 + $0x18] sm:$0xff]
          %v668 = vld [vmem:[#allocation8 + $0x20] sm:$0xff]
          %v669 = vld [vmem:[#allocation8 + $0x28] sm:$0xff]
          %v670 = vld [vmem:[#allocation8 + $0x30] sm:$0xff]
          %v671 = vld [vmem:[#allocation8 + $0x38] sm:$0xff]
          %v672 = vld [vmem:[#allocation8 + $0x40] sm:$0xff]
          %v673 = vld [vmem:[#allocation8 + $0x48] sm:$0xff]
          %v674 = vld [vmem:[#allocation8 + $0x50] sm:$0xff]
          %v675 = vld [vmem:[#allocation8 + $0x58] sm:$0xff]
          %v676 = vld [vmem:[#allocation8 + $0x60] sm:$0xff]
          %v677 = vld [vmem:[#allocation8 + $0x68] sm:$0xff]
          %v678 = vld [vmem:[#allocation8 + $0x70] sm:$0xff]
          %v679 = vld [vmem:[#allocation8 + $0x78] sm:$0xff]
          %v680 = vld [vmem:[#allocation8 + $0x80] sm:$0xff]
          %v681 = vld [vmem:[#allocation8 + $0x88] sm:$0xff]
          %v682 = vld [vmem:[#allocation8 + $0x90] sm:$0xff]
          %v683 = vld [vmem:[#allocation8 + $0x98] sm:$0xff]
          %v684 = vld [vmem:[#allocation8 + $0xa0] sm:$0xff]
          %v685 = vld [vmem:[#allocation8 + $0xa8] sm:$0xff]
          %v686 = vld [vmem:[#allocation8 + $0xb0] sm:$0xff]
          %v687 = vld [vmem:[#allocation8 + $0xb8] sm:$0xff]
          %v688 = vld [vmem:[#allocation8 + $0xc0] sm:$0xff]
          %v689 = vld [vmem:[#allocation8 + $0xc8] sm:$0xff]
          %v690 = vld [vmem:[#allocation8 + $0xd0] sm:$0xff]
          %v691 = vld [vmem:[#allocation8 + $0xd8] sm:$0xff]
          %v692 = vld [vmem:[#allocation8 + $0xe0] sm:$0xff]
          %v693 = vld [vmem:[#allocation8 + $0xe8] sm:$0xff]
          %v694 = vld [vmem:[#allocation8 + $0xf0] sm:$0xff]
          %v695 = vld [vmem:[#allocation8 + $0xf8] sm:$0xff]
          %v696 = vld [vmem:[#allocation8 + $0x100] sm:$0xff]
          %v697 = vld [vmem:[#allocation8 + $0x108] sm:$0xff]
          %v698 = vld [vmem:[#allocation8 + $0x110] sm:$0xff]
          %v699 = vld [vmem:[#allocation8 + $0x118] sm:$0xff]
          %v700 = vld [vmem:[#allocation8 + $0x120] sm:$0xff]
          %v701 = vld [vmem:[#allocation8 + $0x128] sm:$0xff]
          %v702 = vld [vmem:[#allocation8 + $0x130] sm:$0xff]
          %v703 = vld [vmem:[#allocation8 + $0x138] sm:$0xff]
          %v704 = vld [vmem:[#allocation8 + $0x140] sm:$0xff]
          %v705 = vld [vmem:[#allocation8 + $0x148] sm:$0xff]
          %v706 = vld [vmem:[#allocation8 + $0x150] sm:$0xff]
          %v707 = vld [vmem:[#allocation8 + $0x158] sm:$0xff]
          %v708 = vld [vmem:[#allocation8 + $0x160] sm:$0xff]
          %v709 = vld [vmem:[#allocation8 + $0x168] sm:$0xff]
          %v710 = vld [vmem:[#allocation8 + $0x170] sm:$0xff]
          %v711 = vld [vmem:[#allocation8 + $0x178] sm:$0xff]
          %v712 = vld [vmem:[#allocation9] sm:$0x7]
          %v714 = vperm.slane %v712, 0
          %v715 = vperm.slane %v712, 1
          %v716 = vperm.slane %v712, 2
          %720 = vmatpush.msra.mxu0 %v709
          %721 = vmatpush.msra.mxu0 %v706
          %722 = vmatpush.msra.mxu0 %v703
          %723 = vmatpush.msra.mxu0 %v700
          %724 = vmatpush.msra.mxu0 %v697
          %725 = vmatpush.msra.mxu0 %v694
          %726 = vmatpush.msra.mxu0 %v691
          %727 = vmatpush.msra.mxu0 %v688
          %728 = vmatpush.msra.mxu0 %v685
          %729 = vmatpush.msra.mxu0 %v682
          %730 = vmatpush.msra.mxu0 %v679
          %731 = vmatpush.msra.mxu0 %v676
          %732 = vmatpush.msra.mxu0 %v673
          %733 = vmatpush.msra.mxu0 %v670
          %734 = vmatpush.msra.mxu0 %v667
          %735 = vmatpush.msra.mxu0 %v664
          %736 = vmatmul.f32.gmra.mxu0 %v397
          %v737 = vpop.f32.mrf.mxu0
          %v738 = vadd.f32 %v714, %v737
          %739 = vmatmul.f32.gmra.mxu0 %v398
          %v740 = vpop.f32.mrf.mxu0
          %v741 = vadd.f32 %v714, %v740
          %742 = vmatmul.f32.gmra.mxu0 %v399
          %v743 = vpop.f32.mrf.mxu0
          %v744 = vadd.f32 %v714, %v743
          %745 = vmatmul.f32.gmra.mxu0 %v400
          %v746 = vpop.f32.mrf.mxu0
          %v747 = vadd.f32 %v714, %v746
          %748 = vmatmul.f32.gmra.mxu0 %v401
          %v749 = vpop.f32.mrf.mxu0
          %v750 = vadd.f32 %v714, %v749
          %751 = vmatmul.f32.gmra.mxu0 %v402
          %v752 = vpop.f32.mrf.mxu0
          %v753 = vadd.f32 %v714, %v752
          %754 = vmatmul.f32.gmra.mxu0 %v403
          %v755 = vpop.f32.mrf.mxu0
          %v756 = vadd.f32 %v714, %v755
          %757 = vmatmul.f32.gmra.mxu0 %v404
          %v758 = vpop.f32.mrf.mxu0
          %v759 = vadd.f32 %v714, %v758
          %760 = vmatmul.f32.gmra.mxu0 %v405
          %v761 = vpop.f32.mrf.mxu0
          %v762 = vadd.f32 %v714, %v761
          %763 = vmatmul.f32.gmra.mxu0 %v406
          %v764 = vpop.f32.mrf.mxu0
          %v765 = vadd.f32 %v714, %v764
          %766 = vmatmul.f32.gmra.mxu0 %v407
          %v767 = vpop.f32.mrf.mxu0
          %v768 = vadd.f32 %v714, %v767
          %769 = vmatmul.f32.gmra.mxu0 %v408
          %v770 = vpop.f32.mrf.mxu0
          %v771 = vadd.f32 %v714, %v770
          %772 = vmatmul.f32.gmra.mxu0 %v409
          %v773 = vpop.f32.mrf.mxu0
          %v774 = vadd.f32 %v714, %v773
          %775 = vmatmul.f32.gmra.mxu0 %v410
          %v776 = vpop.f32.mrf.mxu0
          %v777 = vadd.f32 %v714, %v776
          %778 = vmatmul.f32.gmra.mxu0 %v411
          %v779 = vpop.f32.mrf.mxu0
          %v780 = vadd.f32 %v714, %v779
          %781 = vmatmul.f32.gmra.mxu0 %v412
          %v782 = vpop.f32.mrf.mxu0
          %v783 = vadd.f32 %v714, %v782
          %784 = vdwg.mxu0
          %785 = vmatpush.msra.mxu0 %v710
          %786 = vmatpush.msra.mxu0 %v707
          %787 = vmatpush.msra.mxu0 %v704
          %788 = vmatpush.msra.mxu0 %v701
          %789 = vmatpush.msra.mxu0 %v698
          %790 = vmatpush.msra.mxu0 %v695
          %791 = vmatpush.msra.mxu0 %v692
          %792 = vmatpush.msra.mxu0 %v689
          %793 = vmatpush.msra.mxu0 %v686
          %794 = vmatpush.msra.mxu0 %v683
          %795 = vmatpush.msra.mxu0 %v680
          %796 = vmatpush.msra.mxu0 %v677
          %797 = vmatpush.msra.mxu0 %v674
          %798 = vmatpush.msra.mxu0 %v671
          %799 = vmatpush.msra.mxu0 %v668
          %800 = vmatpush.msra.mxu0 %v665
          %801 = vmatmul.f32.gmra.mxu0 %v397
          %v802 = vpop.f32.mrf.mxu0
          %v803 = vadd.f32 %v715, %v802
          %804 = vmatmul.f32.gmra.mxu0 %v398
          %v805 = vpop.f32.mrf.mxu0
          %v806 = vadd.f32 %v715, %v805
          %807 = vmatmul.f32.gmra.mxu0 %v399
          %v808 = vpop.f32.mrf.mxu0
          %v809 = vadd.f32 %v715, %v808
          %810 = vmatmul.f32.gmra.mxu0 %v400
          %v811 = vpop.f32.mrf.mxu0
          %v812 = vadd.f32 %v715, %v811
          %813 = vmatmul.f32.gmra.mxu0 %v401
          %v814 = vpop.f32.mrf.mxu0
          %v815 = vadd.f32 %v715, %v814
          %816 = vmatmul.f32.gmra.mxu0 %v402
          %v817 = vpop.f32.mrf.mxu0
          %v818 = vadd.f32 %v715, %v817
          %819 = vmatmul.f32.gmra.mxu0 %v403
          %v820 = vpop.f32.mrf.mxu0
          %v821 = vadd.f32 %v715, %v820
          %822 = vmatmul.f32.gmra.mxu0 %v404
          %v823 = vpop.f32.mrf.mxu0
          %v824 = vadd.f32 %v715, %v823
          %825 = vmatmul.f32.gmra.mxu0 %v405
          %v826 = vpop.f32.mrf.mxu0
          %v827 = vadd.f32 %v715, %v826
          %828 = vmatmul.f32.gmra.mxu0 %v406
          %v829 = vpop.f32.mrf.mxu0
          %v830 = vadd.f32 %v715, %v829
          %831 = vmatmul.f32.gmra.mxu0 %v407
          %v832 = vpop.f32.mrf.mxu0
          %v833 = vadd.f32 %v715, %v832
          %834 = vmatmul.f32.gmra.mxu0 %v408
          %v835 = vpop.f32.mrf.mxu0
          %v836 = vadd.f32 %v715, %v835
          %837 = vmatmul.f32.gmra.mxu0 %v409
          %v838 = vpop.f32.mrf.mxu0
          %v839 = vadd.f32 %v715, %v838
          %840 = vmatmul.f32.gmra.mxu0 %v410
          %v841 = vpop.f32.mrf.mxu0
          %v842 = vadd.f32 %v715, %v841
          %843 = vmatmul.f32.gmra.mxu0 %v411
          %v844 = vpop.f32.mrf.mxu0
          %v845 = vadd.f32 %v715, %v844
          %846 = vmatmul.f32.gmra.mxu0 %v412
          %v847 = vpop.f32.mrf.mxu0
          %v848 = vadd.f32 %v715, %v847
          %849 = vdwg.mxu0
          %850 = vmatpush.msra.mxu0 %v711
          %851 = vmatpush.msra.mxu0 %v708
          %852 = vmatpush.msra.mxu0 %v705
          %853 = vmatpush.msra.mxu0 %v702
          %854 = vmatpush.msra.mxu0 %v699
          %855 = vmatpush.msra.mxu0 %v696
          %856 = vmatpush.msra.mxu0 %v693
          %857 = vmatpush.msra.mxu0 %v690
          %858 = vmatpush.msra.mxu0 %v687
          %859 = vmatpush.msra.mxu0 %v684
          %860 = vmatpush.msra.mxu0 %v681
          %861 = vmatpush.msra.mxu0 %v678
          %862 = vmatpush.msra.mxu0 %v675
          %863 = vmatpush.msra.mxu0 %v672
          %864 = vmatpush.msra.mxu0 %v669
          %865 = vmatpush.msra.mxu0 %v666
          %866 = vmatmul.f32.gmra.mxu0 %v397
          %v867 = vpop.f32.mrf.mxu0
          %v868 = vadd.f32 %v716, %v867
          %869 = vmatmul.f32.gmra.mxu0 %v398
          %v870 = vpop.f32.mrf.mxu0
          %v871 = vadd.f32 %v716, %v870
          %872 = vmatmul.f32.gmra.mxu0 %v399
          %v873 = vpop.f32.mrf.mxu0
          %v874 = vadd.f32 %v716, %v873
          %875 = vmatmul.f32.gmra.mxu0 %v400
          %v876 = vpop.f32.mrf.mxu0
          %v877 = vadd.f32 %v716, %v876
          %878 = vmatmul.f32.gmra.mxu0 %v401
          %v879 = vpop.f32.mrf.mxu0
          %v880 = vadd.f32 %v716, %v879
          %881 = vmatmul.f32.gmra.mxu0 %v402
          %v882 = vpop.f32.mrf.mxu0
          %v883 = vadd.f32 %v716, %v882
          %884 = vmatmul.f32.gmra.mxu0 %v403
          %v885 = vpop.f32.mrf.mxu0
          %v886 = vadd.f32 %v716, %v885
          %887 = vmatmul.f32.gmra.mxu0 %v404
          %v888 = vpop.f32.mrf.mxu0
          %v889 = vadd.f32 %v716, %v888
          %890 = vmatmul.f32.gmra.mxu0 %v405
          %v891 = vpop.f32.mrf.mxu0
          %v892 = vadd.f32 %v716, %v891
          %893 = vmatmul.f32.gmra.mxu0 %v406
          %v894 = vpop.f32.mrf.mxu0
          %v895 = vadd.f32 %v716, %v894
          %896 = vmatmul.f32.gmra.mxu0 %v407
          %v897 = vpop.f32.mrf.mxu0
          %v898 = vadd.f32 %v716, %v897
          %899 = vmatmul.f32.gmra.mxu0 %v408
          %v900 = vpop.f32.mrf.mxu0
          %v901 = vadd.f32 %v716, %v900
          %902 = vmatmul.f32.gmra.mxu0 %v409
          %v903 = vpop.f32.mrf.mxu0
          %v904 = vadd.f32 %v716, %v903
          %905 = vmatmul.f32.gmra.mxu0 %v410
          %v906 = vpop.f32.mrf.mxu0
          %v907 = vadd.f32 %v716, %v906
          %908 = vmatmul.f32.gmra.mxu0 %v411
          %v909 = vpop.f32.mrf.mxu0
          %v910 = vadd.f32 %v716, %v909
          %911 = vmatmul.f32.gmra.mxu0 %v412
          %v912 = vpop.f32.mrf.mxu0
          %v913 = vadd.f32 %v716, %v912
          %914 = vdwg.mxu0
          %v915 = vadd.f32 %v487, %v738
          %v916 = vadd.f32 %v490, %v741
          %v917 = vadd.f32 %v493, %v744
          %v918 = vadd.f32 %v496, %v747
          %v919 = vadd.f32 %v499, %v750
          %v920 = vadd.f32 %v502, %v753
          %v921 = vadd.f32 %v505, %v756
          %v922 = vadd.f32 %v508, %v759
          %v923 = vadd.f32 %v511, %v762
          %v924 = vadd.f32 %v514, %v765
          %v925 = vadd.f32 %v517, %v768
          %v926 = vadd.f32 %v520, %v771
          %v927 = vadd.f32 %v523, %v774
          %v928 = vadd.f32 %v526, %v777
          %v929 = vadd.f32 %v529, %v780
          %v930 = vadd.f32 %v532, %v783
          %v931 = vxor.u32 %v915, 2147483648
          %v932 = vxor.u32 %v916, 2147483648
          %v933 = vxor.u32 %v917, 2147483648
          %v934 = vxor.u32 %v918, 2147483648
          %v935 = vxor.u32 %v919, 2147483648
          %v936 = vxor.u32 %v920, 2147483648
          %v937 = vxor.u32 %v921, 2147483648
          %v938 = vxor.u32 %v922, 2147483648
          %v939 = vxor.u32 %v923, 2147483648
          %v940 = vxor.u32 %v924, 2147483648
          %v941 = vxor.u32 %v925, 2147483648
          %v942 = vxor.u32 %v926, 2147483648
          %v943 = vxor.u32 %v927, 2147483648
          %v944 = vxor.u32 %v928, 2147483648
          %v945 = vxor.u32 %v929, 2147483648
          %v946 = vxor.u32 %v930, 2147483648
          %v947 = vmul.f32 %v931, 1.442695
          %v948 = vpow.pop %v947
          %v949 = vmul.f32 %v932, 1.442695
          %v950 = vpow.pop %v949
          %v951 = vmul.f32 %v933, 1.442695
          %v952 = vpow.pop %v951
          %v953 = vmul.f32 %v934, 1.442695
          %v954 = vpow.pop %v953
          %v955 = vmul.f32 %v935, 1.442695
          %v956 = vpow.pop %v955
          %v957 = vmul.f32 %v936, 1.442695
          %v958 = vpow.pop %v957
          %v959 = vmul.f32 %v937, 1.442695
          %v960 = vpow.pop %v959
          %v961 = vmul.f32 %v938, 1.442695
          %v962 = vpow.pop %v961
          %v963 = vmul.f32 %v939, 1.442695
          %v964 = vpow.pop %v963
          %v965 = vmul.f32 %v940, 1.442695
          %v966 = vpow.pop %v965
          %v967 = vmul.f32 %v941, 1.442695
          %v968 = vpow.pop %v967
          %v969 = vmul.f32 %v942, 1.442695
          %v970 = vpow.pop %v969
          %v971 = vmul.f32 %v943, 1.442695
          %v972 = vpow.pop %v971
          %v973 = vmul.f32 %v944, 1.442695
          %v974 = vpow.pop %v973
          %v975 = vmul.f32 %v945, 1.442695
          %v976 = vpow.pop %v975
          %v977 = vmul.f32 %v946, 1.442695
          %v978 = vpow.pop %v977
          %v979 = vadd.f32 %v948, 1.0
          %v980 = vadd.f32 %v950, 1.0
          %v981 = vadd.f32 %v952, 1.0
          %v982 = vadd.f32 %v954, 1.0
          %v983 = vadd.f32 %v956, 1.0
          %v984 = vadd.f32 %v958, 1.0
          %v985 = vadd.f32 %v960, 1.0
          %v986 = vadd.f32 %v962, 1.0
          %v987 = vadd.f32 %v964, 1.0
          %v988 = vadd.f32 %v966, 1.0
          %v989 = vadd.f32 %v968, 1.0
          %v990 = vadd.f32 %v970, 1.0
          %v991 = vadd.f32 %v972, 1.0
          %v992 = vadd.f32 %v974, 1.0
          %v993 = vadd.f32 %v976, 1.0
          %v994 = vadd.f32 %v978, 1.0
          %v995 = vrcp.pop %v979
          %v996 = vmul.f32 %v979, %v995
          %v997 = vsub.f32 1.0, %v996
          %v998 = vmul.f32 %v995, %v997
          %v999 = vadd.f32 %v995, %v998
          %vm1000 = vweird.f32 %v979
          %vm1001 = vweird.f32 %v995
          %vm1002 = vmor %vm1000, %vm1001
          %v1003 = vsel %vm1002, %v995, %v999
          %v1004 = vand.u32 2147483647, %v979
          %vm1005 = vcmp.eq.f32.partialorder %v1004, 8.507059e+37
          %v1006 = vand.u32 %v979, 2147483648
          %v1007 = vor.u32 1.1754944e-38, %v1006
          %v1008 = vsel %vm1005, %v1007, %v1003
          %v1009 = vmul.f32 1.0, %v1008
          %v1010 = vrcp.pop %v980
          %v1011 = vmul.f32 %v980, %v1010
          %v1012 = vsub.f32 1.0, %v1011
          %v1013 = vmul.f32 %v1010, %v1012
          %v1014 = vadd.f32 %v1010, %v1013
          %vm1015 = vweird.f32 %v980
          %vm1016 = vweird.f32 %v1010
          %vm1017 = vmor %vm1015, %vm1016
          %v1018 = vsel %vm1017, %v1010, %v1014
          %v1019 = vand.u32 2147483647, %v980
          %vm1020 = vcmp.eq.f32.partialorder %v1019, 8.507059e+37
          %v1021 = vand.u32 %v980, 2147483648
          %v1022 = vor.u32 1.1754944e-38, %v1021
          %v1023 = vsel %vm1020, %v1022, %v1018
          %v1024 = vmul.f32 1.0, %v1023
          %v1025 = vrcp.pop %v981
          %v1026 = vmul.f32 %v981, %v1025
          %v1027 = vsub.f32 1.0, %v1026
          %v1028 = vmul.f32 %v1025, %v1027
          %v1029 = vadd.f32 %v1025, %v1028
          %vm1030 = vweird.f32 %v981
          %vm1031 = vweird.f32 %v1025
          %vm1032 = vmor %vm1030, %vm1031
          %v1033 = vsel %vm1032, %v1025, %v1029
          %v1034 = vand.u32 2147483647, %v981
          %vm1035 = vcmp.eq.f32.partialorder %v1034, 8.507059e+37
          %v1036 = vand.u32 %v981, 2147483648
          %v1037 = vor.u32 1.1754944e-38, %v1036
          %v1038 = vsel %vm1035, %v1037, %v1033
          %v1039 = vmul.f32 1.0, %v1038
          %v1040 = vrcp.pop %v982
          %v1041 = vmul.f32 %v982, %v1040
          %v1042 = vsub.f32 1.0, %v1041
          %v1043 = vmul.f32 %v1040, %v1042
          %v1044 = vadd.f32 %v1040, %v1043
          %vm1045 = vweird.f32 %v982
          %vm1046 = vweird.f32 %v1040
          %vm1047 = vmor %vm1045, %vm1046
          %v1048 = vsel %vm1047, %v1040, %v1044
          %v1049 = vand.u32 2147483647, %v982
          %vm1050 = vcmp.eq.f32.partialorder %v1049, 8.507059e+37
          %v1051 = vand.u32 %v982, 2147483648
          %v1052 = vor.u32 1.1754944e-38, %v1051
          %v1053 = vsel %vm1050, %v1052, %v1048
          %v1054 = vmul.f32 1.0, %v1053
          %v1055 = vrcp.pop %v983
          %v1056 = vmul.f32 %v983, %v1055
          %v1057 = vsub.f32 1.0, %v1056
          %v1058 = vmul.f32 %v1055, %v1057
          %v1059 = vadd.f32 %v1055, %v1058
          %vm1060 = vweird.f32 %v983
          %vm1061 = vweird.f32 %v1055
          %vm1062 = vmor %vm1060, %vm1061
          %v1063 = vsel %vm1062, %v1055, %v1059
          %v1064 = vand.u32 2147483647, %v983
          %vm1065 = vcmp.eq.f32.partialorder %v1064, 8.507059e+37
          %v1066 = vand.u32 %v983, 2147483648
          %v1067 = vor.u32 1.1754944e-38, %v1066
          %v1068 = vsel %vm1065, %v1067, %v1063
          %v1069 = vmul.f32 1.0, %v1068
          %v1070 = vrcp.pop %v984
          %v1071 = vmul.f32 %v984, %v1070
          %v1072 = vsub.f32 1.0, %v1071
          %v1073 = vmul.f32 %v1070, %v1072
          %v1074 = vadd.f32 %v1070, %v1073
          %vm1075 = vweird.f32 %v984
          %vm1076 = vweird.f32 %v1070
          %vm1077 = vmor %vm1075, %vm1076
          %v1078 = vsel %vm1077, %v1070, %v1074
          %v1079 = vand.u32 2147483647, %v984
          %vm1080 = vcmp.eq.f32.partialorder %v1079, 8.507059e+37
          %v1081 = vand.u32 %v984, 2147483648
          %v1082 = vor.u32 1.1754944e-38, %v1081
          %v1083 = vsel %vm1080, %v1082, %v1078
          %v1084 = vmul.f32 1.0, %v1083
          %v1085 = vrcp.pop %v985
          %v1086 = vmul.f32 %v985, %v1085
          %v1087 = vsub.f32 1.0, %v1086
          %v1088 = vmul.f32 %v1085, %v1087
          %v1089 = vadd.f32 %v1085, %v1088
          %vm1090 = vweird.f32 %v985
          %vm1091 = vweird.f32 %v1085
          %vm1092 = vmor %vm1090, %vm1091
          %v1093 = vsel %vm1092, %v1085, %v1089
          %v1094 = vand.u32 2147483647, %v985
          %vm1095 = vcmp.eq.f32.partialorder %v1094, 8.507059e+37
          %v1096 = vand.u32 %v985, 2147483648
          %v1097 = vor.u32 1.1754944e-38, %v1096
          %v1098 = vsel %vm1095, %v1097, %v1093
          %v1099 = vmul.f32 1.0, %v1098
          %v1100 = vrcp.pop %v986
          %v1101 = vmul.f32 %v986, %v1100
          %v1102 = vsub.f32 1.0, %v1101
          %v1103 = vmul.f32 %v1100, %v1102
          %v1104 = vadd.f32 %v1100, %v1103
          %vm1105 = vweird.f32 %v986
          %vm1106 = vweird.f32 %v1100
          %vm1107 = vmor %vm1105, %vm1106
          %v1108 = vsel %vm1107, %v1100, %v1104
          %v1109 = vand.u32 2147483647, %v986
          %vm1110 = vcmp.eq.f32.partialorder %v1109, 8.507059e+37
          %v1111 = vand.u32 %v986, 2147483648
          %v1112 = vor.u32 1.1754944e-38, %v1111
          %v1113 = vsel %vm1110, %v1112, %v1108
          %v1114 = vmul.f32 1.0, %v1113
          %v1115 = vrcp.pop %v987
          %v1116 = vmul.f32 %v987, %v1115
          %v1117 = vsub.f32 1.0, %v1116
          %v1118 = vmul.f32 %v1115, %v1117
          %v1119 = vadd.f32 %v1115, %v1118
          %vm1120 = vweird.f32 %v987
          %vm1121 = vweird.f32 %v1115
          %vm1122 = vmor %vm1120, %vm1121
          %v1123 = vsel %vm1122, %v1115, %v1119
          %v1124 = vand.u32 2147483647, %v987
          %vm1125 = vcmp.eq.f32.partialorder %v1124, 8.507059e+37
          %v1126 = vand.u32 %v987, 2147483648
          %v1127 = vor.u32 1.1754944e-38, %v1126
          %v1128 = vsel %vm1125, %v1127, %v1123
          %v1129 = vmul.f32 1.0, %v1128
          %v1130 = vrcp.pop %v988
          %v1131 = vmul.f32 %v988, %v1130
          %v1132 = vsub.f32 1.0, %v1131
          %v1133 = vmul.f32 %v1130, %v1132
          %v1134 = vadd.f32 %v1130, %v1133
          %vm1135 = vweird.f32 %v988
          %vm1136 = vweird.f32 %v1130
          %vm1137 = vmor %vm1135, %vm1136
          %v1138 = vsel %vm1137, %v1130, %v1134
          %v1139 = vand.u32 2147483647, %v988
          %vm1140 = vcmp.eq.f32.partialorder %v1139, 8.507059e+37
          %v1141 = vand.u32 %v988, 2147483648
          %v1142 = vor.u32 1.1754944e-38, %v1141
          %v1143 = vsel %vm1140, %v1142, %v1138
          %v1144 = vmul.f32 1.0, %v1143
          %v1145 = vrcp.pop %v989
          %v1146 = vmul.f32 %v989, %v1145
          %v1147 = vsub.f32 1.0, %v1146
          %v1148 = vmul.f32 %v1145, %v1147
          %v1149 = vadd.f32 %v1145, %v1148
          %vm1150 = vweird.f32 %v989
          %vm1151 = vweird.f32 %v1145
          %vm1152 = vmor %vm1150, %vm1151
          %v1153 = vsel %vm1152, %v1145, %v1149
          %v1154 = vand.u32 2147483647, %v989
          %vm1155 = vcmp.eq.f32.partialorder %v1154, 8.507059e+37
          %v1156 = vand.u32 %v989, 2147483648
          %v1157 = vor.u32 1.1754944e-38, %v1156
          %v1158 = vsel %vm1155, %v1157, %v1153
          %v1159 = vmul.f32 1.0, %v1158
          %v1160 = vrcp.pop %v990
          %v1161 = vmul.f32 %v990, %v1160
          %v1162 = vsub.f32 1.0, %v1161
          %v1163 = vmul.f32 %v1160, %v1162
          %v1164 = vadd.f32 %v1160, %v1163
          %vm1165 = vweird.f32 %v990
          %vm1166 = vweird.f32 %v1160
          %vm1167 = vmor %vm1165, %vm1166
          %v1168 = vsel %vm1167, %v1160, %v1164
          %v1169 = vand.u32 2147483647, %v990
          %vm1170 = vcmp.eq.f32.partialorder %v1169, 8.507059e+37
          %v1171 = vand.u32 %v990, 2147483648
          %v1172 = vor.u32 1.1754944e-38, %v1171
          %v1173 = vsel %vm1170, %v1172, %v1168
          %v1174 = vmul.f32 1.0, %v1173
          %v1175 = vrcp.pop %v991
          %v1176 = vmul.f32 %v991, %v1175
          %v1177 = vsub.f32 1.0, %v1176
          %v1178 = vmul.f32 %v1175, %v1177
          %v1179 = vadd.f32 %v1175, %v1178
          %vm1180 = vweird.f32 %v991
          %vm1181 = vweird.f32 %v1175
          %vm1182 = vmor %vm1180, %vm1181
          %v1183 = vsel %vm1182, %v1175, %v1179
          %v1184 = vand.u32 2147483647, %v991
          %vm1185 = vcmp.eq.f32.partialorder %v1184, 8.507059e+37
          %v1186 = vand.u32 %v991, 2147483648
          %v1187 = vor.u32 1.1754944e-38, %v1186
          %v1188 = vsel %vm1185, %v1187, %v1183
          %v1189 = vmul.f32 1.0, %v1188
          %v1190 = vrcp.pop %v992
          %v1191 = vmul.f32 %v992, %v1190
          %v1192 = vsub.f32 1.0, %v1191
          %v1193 = vmul.f32 %v1190, %v1192
          %v1194 = vadd.f32 %v1190, %v1193
          %vm1195 = vweird.f32 %v992
          %vm1196 = vweird.f32 %v1190
          %vm1197 = vmor %vm1195, %vm1196
          %v1198 = vsel %vm1197, %v1190, %v1194
          %v1199 = vand.u32 2147483647, %v992
          %vm1200 = vcmp.eq.f32.partialorder %v1199, 8.507059e+37
          %v1201 = vand.u32 %v992, 2147483648
          %v1202 = vor.u32 1.1754944e-38, %v1201
          %v1203 = vsel %vm1200, %v1202, %v1198
          %v1204 = vmul.f32 1.0, %v1203
          %v1205 = vrcp.pop %v993
          %v1206 = vmul.f32 %v993, %v1205
          %v1207 = vsub.f32 1.0, %v1206
          %v1208 = vmul.f32 %v1205, %v1207
          %v1209 = vadd.f32 %v1205, %v1208
          %vm1210 = vweird.f32 %v993
          %vm1211 = vweird.f32 %v1205
          %vm1212 = vmor %vm1210, %vm1211
          %v1213 = vsel %vm1212, %v1205, %v1209
          %v1214 = vand.u32 2147483647, %v993
          %vm1215 = vcmp.eq.f32.partialorder %v1214, 8.507059e+37
          %v1216 = vand.u32 %v993, 2147483648
          %v1217 = vor.u32 1.1754944e-38, %v1216
          %v1218 = vsel %vm1215, %v1217, %v1213
          %v1219 = vmul.f32 1.0, %v1218
          %v1220 = vrcp.pop %v994
          %v1221 = vmul.f32 %v994, %v1220
          %v1222 = vsub.f32 1.0, %v1221
          %v1223 = vmul.f32 %v1220, %v1222
          %v1224 = vadd.f32 %v1220, %v1223
          %vm1225 = vweird.f32 %v994
          %vm1226 = vweird.f32 %v1220
          %vm1227 = vmor %vm1225, %vm1226
          %v1228 = vsel %vm1227, %v1220, %v1224
          %v1229 = vand.u32 2147483647, %v994
          %vm1230 = vcmp.eq.f32.partialorder %v1229, 8.507059e+37
          %v1231 = vand.u32 %v994, 2147483648
          %v1232 = vor.u32 1.1754944e-38, %v1231
          %v1233 = vsel %vm1230, %v1232, %v1228
          %v1234 = vmul.f32 1.0, %v1233
          %v1235 = vadd.f32 %v552, %v803
          %v1236 = vadd.f32 %v555, %v806
          %v1237 = vadd.f32 %v558, %v809
          %v1238 = vadd.f32 %v561, %v812
          %v1239 = vadd.f32 %v564, %v815
          %v1240 = vadd.f32 %v567, %v818
          %v1241 = vadd.f32 %v570, %v821
          %v1242 = vadd.f32 %v573, %v824
          %v1243 = vadd.f32 %v576, %v827
          %v1244 = vadd.f32 %v579, %v830
          %v1245 = vadd.f32 %v582, %v833
          %v1246 = vadd.f32 %v585, %v836
          %v1247 = vadd.f32 %v588, %v839
          %v1248 = vadd.f32 %v591, %v842
          %v1249 = vadd.f32 %v594, %v845
          %v1250 = vadd.f32 %v597, %v848
          %v1251 = vxor.u32 %v1235, 2147483648
          %v1252 = vxor.u32 %v1236, 2147483648
          %v1253 = vxor.u32 %v1237, 2147483648
          %v1254 = vxor.u32 %v1238, 2147483648
          %v1255 = vxor.u32 %v1239, 2147483648
          %v1256 = vxor.u32 %v1240, 2147483648
          %v1257 = vxor.u32 %v1241, 2147483648
          %v1258 = vxor.u32 %v1242, 2147483648
          %v1259 = vxor.u32 %v1243, 2147483648
          %v1260 = vxor.u32 %v1244, 2147483648
          %v1261 = vxor.u32 %v1245, 2147483648
          %v1262 = vxor.u32 %v1246, 2147483648
          %v1263 = vxor.u32 %v1247, 2147483648
          %v1264 = vxor.u32 %v1248, 2147483648
          %v1265 = vxor.u32 %v1249, 2147483648
          %v1266 = vxor.u32 %v1250, 2147483648
          %v1267 = vmul.f32 %v1251, 1.442695
          %v1268 = vpow.pop %v1267
          %v1269 = vmul.f32 %v1252, 1.442695
          %v1270 = vpow.pop %v1269
          %v1271 = vmul.f32 %v1253, 1.442695
          %v1272 = vpow.pop %v1271
          %v1273 = vmul.f32 %v1254, 1.442695
          %v1274 = vpow.pop %v1273
          %v1275 = vmul.f32 %v1255, 1.442695
          %v1276 = vpow.pop %v1275
          %v1277 = vmul.f32 %v1256, 1.442695
          %v1278 = vpow.pop %v1277
          %v1279 = vmul.f32 %v1257, 1.442695
          %v1280 = vpow.pop %v1279
          %v1281 = vmul.f32 %v1258, 1.442695
          %v1282 = vpow.pop %v1281
          %v1283 = vmul.f32 %v1259, 1.442695
          %v1284 = vpow.pop %v1283
          %v1285 = vmul.f32 %v1260, 1.442695
          %v1286 = vpow.pop %v1285
          %v1287 = vmul.f32 %v1261, 1.442695
          %v1288 = vpow.pop %v1287
          %v1289 = vmul.f32 %v1262, 1.442695
          %v1290 = vpow.pop %v1289
          %v1291 = vmul.f32 %v1263, 1.442695
          %v1292 = vpow.pop %v1291
          %v1293 = vmul.f32 %v1264, 1.442695
          %v1294 = vpow.pop %v1293
          %v1295 = vmul.f32 %v1265, 1.442695
          %v1296 = vpow.pop %v1295
          %v1297 = vmul.f32 %v1266, 1.442695
          %v1298 = vpow.pop %v1297
          %v1299 = vadd.f32 %v1268, 1.0
          %v1300 = vadd.f32 %v1270, 1.0
          %v1301 = vadd.f32 %v1272, 1.0
          %v1302 = vadd.f32 %v1274, 1.0
          %v1303 = vadd.f32 %v1276, 1.0
          %v1304 = vadd.f32 %v1278, 1.0
          %v1305 = vadd.f32 %v1280, 1.0
          %v1306 = vadd.f32 %v1282, 1.0
          %v1307 = vadd.f32 %v1284, 1.0
          %v1308 = vadd.f32 %v1286, 1.0
          %v1309 = vadd.f32 %v1288, 1.0
          %v1310 = vadd.f32 %v1290, 1.0
          %v1311 = vadd.f32 %v1292, 1.0
          %v1312 = vadd.f32 %v1294, 1.0
          %v1313 = vadd.f32 %v1296, 1.0
          %v1314 = vadd.f32 %v1298, 1.0
          %v1315 = vrcp.pop %v1299
          %v1316 = vmul.f32 %v1299, %v1315
          %v1317 = vsub.f32 1.0, %v1316
          %v1318 = vmul.f32 %v1315, %v1317
          %v1319 = vadd.f32 %v1315, %v1318
          %vm1320 = vweird.f32 %v1299
          %vm1321 = vweird.f32 %v1315
          %vm1322 = vmor %vm1320, %vm1321
          %v1323 = vsel %vm1322, %v1315, %v1319
          %v1324 = vand.u32 2147483647, %v1299
          %vm1325 = vcmp.eq.f32.partialorder %v1324, 8.507059e+37
          %v1326 = vand.u32 %v1299, 2147483648
          %v1327 = vor.u32 1.1754944e-38, %v1326
          %v1328 = vsel %vm1325, %v1327, %v1323
          %v1329 = vmul.f32 1.0, %v1328
          %v1330 = vrcp.pop %v1300
          %v1331 = vmul.f32 %v1300, %v1330
          %v1332 = vsub.f32 1.0, %v1331
          %v1333 = vmul.f32 %v1330, %v1332
          %v1334 = vadd.f32 %v1330, %v1333
          %vm1335 = vweird.f32 %v1300
          %vm1336 = vweird.f32 %v1330
          %vm1337 = vmor %vm1335, %vm1336
          %v1338 = vsel %vm1337, %v1330, %v1334
          %v1339 = vand.u32 2147483647, %v1300
          %vm1340 = vcmp.eq.f32.partialorder %v1339, 8.507059e+37
          %v1341 = vand.u32 %v1300, 2147483648
          %v1342 = vor.u32 1.1754944e-38, %v1341
          %v1343 = vsel %vm1340, %v1342, %v1338
          %v1344 = vmul.f32 1.0, %v1343
          %v1345 = vrcp.pop %v1301
          %v1346 = vmul.f32 %v1301, %v1345
          %v1347 = vsub.f32 1.0, %v1346
          %v1348 = vmul.f32 %v1345, %v1347
          %v1349 = vadd.f32 %v1345, %v1348
          %vm1350 = vweird.f32 %v1301
          %vm1351 = vweird.f32 %v1345
          %vm1352 = vmor %vm1350, %vm1351
          %v1353 = vsel %vm1352, %v1345, %v1349
          %v1354 = vand.u32 2147483647, %v1301
          %vm1355 = vcmp.eq.f32.partialorder %v1354, 8.507059e+37
          %v1356 = vand.u32 %v1301, 2147483648
          %v1357 = vor.u32 1.1754944e-38, %v1356
          %v1358 = vsel %vm1355, %v1357, %v1353
          %v1359 = vmul.f32 1.0, %v1358
          %v1360 = vrcp.pop %v1302
          %v1361 = vmul.f32 %v1302, %v1360
          %v1362 = vsub.f32 1.0, %v1361
          %v1363 = vmul.f32 %v1360, %v1362
          %v1364 = vadd.f32 %v1360, %v1363
          %vm1365 = vweird.f32 %v1302
          %vm1366 = vweird.f32 %v1360
          %vm1367 = vmor %vm1365, %vm1366
          %v1368 = vsel %vm1367, %v1360, %v1364
          %v1369 = vand.u32 2147483647, %v1302
          %vm1370 = vcmp.eq.f32.partialorder %v1369, 8.507059e+37
          %v1371 = vand.u32 %v1302, 2147483648
          %v1372 = vor.u32 1.1754944e-38, %v1371
          %v1373 = vsel %vm1370, %v1372, %v1368
          %v1374 = vmul.f32 1.0, %v1373
          %v1375 = vrcp.pop %v1303
          %v1376 = vmul.f32 %v1303, %v1375
          %v1377 = vsub.f32 1.0, %v1376
          %v1378 = vmul.f32 %v1375, %v1377
          %v1379 = vadd.f32 %v1375, %v1378
          %vm1380 = vweird.f32 %v1303
          %vm1381 = vweird.f32 %v1375
          %vm1382 = vmor %vm1380, %vm1381
          %v1383 = vsel %vm1382, %v1375, %v1379
          %v1384 = vand.u32 2147483647, %v1303
          %vm1385 = vcmp.eq.f32.partialorder %v1384, 8.507059e+37
          %v1386 = vand.u32 %v1303, 2147483648
          %v1387 = vor.u32 1.1754944e-38, %v1386
          %v1388 = vsel %vm1385, %v1387, %v1383
          %v1389 = vmul.f32 1.0, %v1388
          %v1390 = vrcp.pop %v1304
          %v1391 = vmul.f32 %v1304, %v1390
          %v1392 = vsub.f32 1.0, %v1391
          %v1393 = vmul.f32 %v1390, %v1392
          %v1394 = vadd.f32 %v1390, %v1393
          %vm1395 = vweird.f32 %v1304
          %vm1396 = vweird.f32 %v1390
          %vm1397 = vmor %vm1395, %vm1396
          %v1398 = vsel %vm1397, %v1390, %v1394
          %v1399 = vand.u32 2147483647, %v1304
          %vm1400 = vcmp.eq.f32.partialorder %v1399, 8.507059e+37
          %v1401 = vand.u32 %v1304, 2147483648
          %v1402 = vor.u32 1.1754944e-38, %v1401
          %v1403 = vsel %vm1400, %v1402, %v1398
          %v1404 = vmul.f32 1.0, %v1403
          %v1405 = vrcp.pop %v1305
          %v1406 = vmul.f32 %v1305, %v1405
          %v1407 = vsub.f32 1.0, %v1406
          %v1408 = vmul.f32 %v1405, %v1407
          %v1409 = vadd.f32 %v1405, %v1408
          %vm1410 = vweird.f32 %v1305
          %vm1411 = vweird.f32 %v1405
          %vm1412 = vmor %vm1410, %vm1411
          %v1413 = vsel %vm1412, %v1405, %v1409
          %v1414 = vand.u32 2147483647, %v1305
          %vm1415 = vcmp.eq.f32.partialorder %v1414, 8.507059e+37
          %v1416 = vand.u32 %v1305, 2147483648
          %v1417 = vor.u32 1.1754944e-38, %v1416
          %v1418 = vsel %vm1415, %v1417, %v1413
          %v1419 = vmul.f32 1.0, %v1418
          %v1420 = vrcp.pop %v1306
          %v1421 = vmul.f32 %v1306, %v1420
          %v1422 = vsub.f32 1.0, %v1421
          %v1423 = vmul.f32 %v1420, %v1422
          %v1424 = vadd.f32 %v1420, %v1423
          %vm1425 = vweird.f32 %v1306
          %vm1426 = vweird.f32 %v1420
          %vm1427 = vmor %vm1425, %vm1426
          %v1428 = vsel %vm1427, %v1420, %v1424
          %v1429 = vand.u32 2147483647, %v1306
          %vm1430 = vcmp.eq.f32.partialorder %v1429, 8.507059e+37
          %v1431 = vand.u32 %v1306, 2147483648
          %v1432 = vor.u32 1.1754944e-38, %v1431
          %v1433 = vsel %vm1430, %v1432, %v1428
          %v1434 = vmul.f32 1.0, %v1433
          %v1435 = vrcp.pop %v1307
          %v1436 = vmul.f32 %v1307, %v1435
          %v1437 = vsub.f32 1.0, %v1436
          %v1438 = vmul.f32 %v1435, %v1437
          %v1439 = vadd.f32 %v1435, %v1438
          %vm1440 = vweird.f32 %v1307
          %vm1441 = vweird.f32 %v1435
          %vm1442 = vmor %vm1440, %vm1441
          %v1443 = vsel %vm1442, %v1435, %v1439
          %v1444 = vand.u32 2147483647, %v1307
          %vm1445 = vcmp.eq.f32.partialorder %v1444, 8.507059e+37
          %v1446 = vand.u32 %v1307, 2147483648
          %v1447 = vor.u32 1.1754944e-38, %v1446
          %v1448 = vsel %vm1445, %v1447, %v1443
          %v1449 = vmul.f32 1.0, %v1448
          %v1450 = vrcp.pop %v1308
          %v1451 = vmul.f32 %v1308, %v1450
          %v1452 = vsub.f32 1.0, %v1451
          %v1453 = vmul.f32 %v1450, %v1452
          %v1454 = vadd.f32 %v1450, %v1453
          %vm1455 = vweird.f32 %v1308
          %vm1456 = vweird.f32 %v1450
          %vm1457 = vmor %vm1455, %vm1456
          %v1458 = vsel %vm1457, %v1450, %v1454
          %v1459 = vand.u32 2147483647, %v1308
          %vm1460 = vcmp.eq.f32.partialorder %v1459, 8.507059e+37
          %v1461 = vand.u32 %v1308, 2147483648
          %v1462 = vor.u32 1.1754944e-38, %v1461
          %v1463 = vsel %vm1460, %v1462, %v1458
          %v1464 = vmul.f32 1.0, %v1463
          %v1465 = vrcp.pop %v1309
          %v1466 = vmul.f32 %v1309, %v1465
          %v1467 = vsub.f32 1.0, %v1466
          %v1468 = vmul.f32 %v1465, %v1467
          %v1469 = vadd.f32 %v1465, %v1468
          %vm1470 = vweird.f32 %v1309
          %vm1471 = vweird.f32 %v1465
          %vm1472 = vmor %vm1470, %vm1471
          %v1473 = vsel %vm1472, %v1465, %v1469
          %v1474 = vand.u32 2147483647, %v1309
          %vm1475 = vcmp.eq.f32.partialorder %v1474, 8.507059e+37
          %v1476 = vand.u32 %v1309, 2147483648
          %v1477 = vor.u32 1.1754944e-38, %v1476
          %v1478 = vsel %vm1475, %v1477, %v1473
          %v1479 = vmul.f32 1.0, %v1478
          %v1480 = vrcp.pop %v1310
          %v1481 = vmul.f32 %v1310, %v1480
          %v1482 = vsub.f32 1.0, %v1481
          %v1483 = vmul.f32 %v1480, %v1482
          %v1484 = vadd.f32 %v1480, %v1483
          %vm1485 = vweird.f32 %v1310
          %vm1486 = vweird.f32 %v1480
          %vm1487 = vmor %vm1485, %vm1486
          %v1488 = vsel %vm1487, %v1480, %v1484
          %v1489 = vand.u32 2147483647, %v1310
          %vm1490 = vcmp.eq.f32.partialorder %v1489, 8.507059e+37
          %v1491 = vand.u32 %v1310, 2147483648
          %v1492 = vor.u32 1.1754944e-38, %v1491
          %v1493 = vsel %vm1490, %v1492, %v1488
          %v1494 = vmul.f32 1.0, %v1493
          %v1495 = vrcp.pop %v1311
          %v1496 = vmul.f32 %v1311, %v1495
          %v1497 = vsub.f32 1.0, %v1496
          %v1498 = vmul.f32 %v1495, %v1497
          %v1499 = vadd.f32 %v1495, %v1498
          %vm1500 = vweird.f32 %v1311
          %vm1501 = vweird.f32 %v1495
          %vm1502 = vmor %vm1500, %vm1501
          %v1503 = vsel %vm1502, %v1495, %v1499
          %v1504 = vand.u32 2147483647, %v1311
          %vm1505 = vcmp.eq.f32.partialorder %v1504, 8.507059e+37
          %v1506 = vand.u32 %v1311, 2147483648
          %v1507 = vor.u32 1.1754944e-38, %v1506
          %v1508 = vsel %vm1505, %v1507, %v1503
          %v1509 = vmul.f32 1.0, %v1508
          %v1510 = vrcp.pop %v1312
          %v1511 = vmul.f32 %v1312, %v1510
          %v1512 = vsub.f32 1.0, %v1511
          %v1513 = vmul.f32 %v1510, %v1512
          %v1514 = vadd.f32 %v1510, %v1513
          %vm1515 = vweird.f32 %v1312
          %vm1516 = vweird.f32 %v1510
          %vm1517 = vmor %vm1515, %vm1516
          %v1518 = vsel %vm1517, %v1510, %v1514
          %v1519 = vand.u32 2147483647, %v1312
          %vm1520 = vcmp.eq.f32.partialorder %v1519, 8.507059e+37
          %v1521 = vand.u32 %v1312, 2147483648
          %v1522 = vor.u32 1.1754944e-38, %v1521
          %v1523 = vsel %vm1520, %v1522, %v1518
          %v1524 = vmul.f32 1.0, %v1523
          %v1525 = vrcp.pop %v1313
          %v1526 = vmul.f32 %v1313, %v1525
          %v1527 = vsub.f32 1.0, %v1526
          %v1528 = vmul.f32 %v1525, %v1527
          %v1529 = vadd.f32 %v1525, %v1528
          %vm1530 = vweird.f32 %v1313
          %vm1531 = vweird.f32 %v1525
          %vm1532 = vmor %vm1530, %vm1531
          %v1533 = vsel %vm1532, %v1525, %v1529
          %v1534 = vand.u32 2147483647, %v1313
          %vm1535 = vcmp.eq.f32.partialorder %v1534, 8.507059e+37
          %v1536 = vand.u32 %v1313, 2147483648
          %v1537 = vor.u32 1.1754944e-38, %v1536
          %v1538 = vsel %vm1535, %v1537, %v1533
          %v1539 = vmul.f32 1.0, %v1538
          %v1540 = vrcp.pop %v1314
          %v1541 = vmul.f32 %v1314, %v1540
          %v1542 = vsub.f32 1.0, %v1541
          %v1543 = vmul.f32 %v1540, %v1542
          %v1544 = vadd.f32 %v1540, %v1543
          %vm1545 = vweird.f32 %v1314
          %vm1546 = vweird.f32 %v1540
          %vm1547 = vmor %vm1545, %vm1546
          %v1548 = vsel %vm1547, %v1540, %v1544
          %v1549 = vand.u32 2147483647, %v1314
          %vm1550 = vcmp.eq.f32.partialorder %v1549, 8.507059e+37
          %v1551 = vand.u32 %v1314, 2147483648
          %v1552 = vor.u32 1.1754944e-38, %v1551
          %v1553 = vsel %vm1550, %v1552, %v1548
          %v1554 = vmul.f32 1.0, %v1553
          %v1555 = vmul.f32 %v1009, %v868
          %v1556 = vmul.f32 %v1024, %v871
          %v1557 = vmul.f32 %v1039, %v874
          %v1558 = vmul.f32 %v1054, %v877
          %v1559 = vmul.f32 %v1069, %v880
          %v1560 = vmul.f32 %v1084, %v883
          %v1561 = vmul.f32 %v1099, %v886
          %v1562 = vmul.f32 %v1114, %v889
          %v1563 = vmul.f32 %v1129, %v892
          %v1564 = vmul.f32 %v1144, %v895
          %v1565 = vmul.f32 %v1159, %v898
          %v1566 = vmul.f32 %v1174, %v901
          %v1567 = vmul.f32 %v1189, %v904
          %v1568 = vmul.f32 %v1204, %v907
          %v1569 = vmul.f32 %v1219, %v910
          %v1570 = vmul.f32 %v1234, %v913
          %v1571 = vadd.f32 %v617, %v1555
          %v1572 = vadd.f32 %v620, %v1556
          %v1573 = vadd.f32 %v623, %v1557
          %v1574 = vadd.f32 %v626, %v1558
          %v1575 = vadd.f32 %v629, %v1559
          %v1576 = vadd.f32 %v632, %v1560
          %v1577 = vadd.f32 %v635, %v1561
          %v1578 = vadd.f32 %v638, %v1562
          %v1579 = vadd.f32 %v641, %v1563
          %v1580 = vadd.f32 %v644, %v1564
          %v1581 = vadd.f32 %v647, %v1565
          %v1582 = vadd.f32 %v650, %v1566
          %v1583 = vadd.f32 %v653, %v1567
          %v1584 = vadd.f32 %v656, %v1568
          %v1585 = vadd.f32 %v659, %v1569
          %v1586 = vadd.f32 %v662, %v1570
          %v1587 = vtanh.pop %v1571
          %v1588 = vtanh.pop %v1572
          %v1589 = vtanh.pop %v1573
          %v1590 = vtanh.pop %v1574
          %v1591 = vtanh.pop %v1575
          %v1592 = vtanh.pop %v1576
          %v1593 = vtanh.pop %v1577
          %v1594 = vtanh.pop %v1578
          %v1595 = vtanh.pop %v1579
          %v1596 = vtanh.pop %v1580
          %v1597 = vtanh.pop %v1581
          %v1598 = vtanh.pop %v1582
          %v1599 = vtanh.pop %v1583
          %v1600 = vtanh.pop %v1584
          %v1601 = vtanh.pop %v1585
          %v1602 = vtanh.pop %v1586
          %v1603 = vsub.f32 1.0, %v1329
          %v1604 = vsub.f32 1.0, %v1344
          %v1605 = vsub.f32 1.0, %v1359
          %v1606 = vsub.f32 1.0, %v1374
          %v1607 = vsub.f32 1.0, %v1389
          %v1608 = vsub.f32 1.0, %v1404
          %v1609 = vsub.f32 1.0, %v1419
          %v1610 = vsub.f32 1.0, %v1434
          %v1611 = vsub.f32 1.0, %v1449
          %v1612 = vsub.f32 1.0, %v1464
          %v1613 = vsub.f32 1.0, %v1479
          %v1614 = vsub.f32 1.0, %v1494
          %v1615 = vsub.f32 1.0, %v1509
          %v1616 = vsub.f32 1.0, %v1524
          %v1617 = vsub.f32 1.0, %v1539
          %v1618 = vsub.f32 1.0, %v1554
          %v1619 = vmul.f32 %v1603, %v1587
          %v1620 = vmul.f32 %v1604, %v1588
          %v1621 = vmul.f32 %v1605, %v1589
          %v1622 = vmul.f32 %v1606, %v1590
          %v1623 = vmul.f32 %v1607, %v1591
          %v1624 = vmul.f32 %v1608, %v1592
          %v1625 = vmul.f32 %v1609, %v1593
          %v1626 = vmul.f32 %v1610, %v1594
          %v1627 = vmul.f32 %v1611, %v1595
          %v1628 = vmul.f32 %v1612, %v1596
          %v1629 = vmul.f32 %v1613, %v1597
          %v1630 = vmul.f32 %v1614, %v1598
          %v1631 = vmul.f32 %v1615, %v1599
          %v1632 = vmul.f32 %v1616, %v1600
          %v1633 = vmul.f32 %v1617, %v1601
          %v1634 = vmul.f32 %v1618, %v1602
          %v1635 = vmul.f32 %v1329, %v397
          %v1636 = vmul.f32 %v1344, %v398
          %v1637 = vmul.f32 %v1359, %v399
          %v1638 = vmul.f32 %v1374, %v400
          %v1639 = vmul.f32 %v1389, %v401
          %v1640 = vmul.f32 %v1404, %v402
          %v1641 = vmul.f32 %v1419, %v403
          %v1642 = vmul.f32 %v1434, %v404
          %v1643 = vmul.f32 %v1449, %v405
          %v1644 = vmul.f32 %v1464, %v406
          %v1645 = vmul.f32 %v1479, %v407
          %v1646 = vmul.f32 %v1494, %v408
          %v1647 = vmul.f32 %v1509, %v409
          %v1648 = vmul.f32 %v1524, %v410
          %v1649 = vmul.f32 %v1539, %v411
          %v1650 = vmul.f32 %v1554, %v412
          %v1651 = vadd.f32 %v1619, %v1635
          %v1652 = vadd.f32 %v1620, %v1636
          %v1653 = vadd.f32 %v1621, %v1637
          %v1654 = vadd.f32 %v1622, %v1638
          %v1655 = vadd.f32 %v1623, %v1639
          %v1656 = vadd.f32 %v1624, %v1640
          %v1657 = vadd.f32 %v1625, %v1641
          %v1658 = vadd.f32 %v1626, %v1642
          %v1659 = vadd.f32 %v1627, %v1643
          %v1660 = vadd.f32 %v1628, %v1644
          %v1661 = vadd.f32 %v1629, %v1645
          %v1662 = vadd.f32 %v1630, %v1646
          %v1663 = vadd.f32 %v1631, %v1647
          %v1664 = vadd.f32 %v1632, %v1648
          %v1665 = vadd.f32 %v1633, %v1649
          %v1666 = vadd.f32 %v1634, %v1650
          %1667 = vst [vmem:[#allocation2] sm:$0xff] %v1651
          %1668 = vst [vmem:[#allocation2 + $0x8] sm:$0xff] %v1652
          %1669 = vst [vmem:[#allocation2 + $0x10] sm:$0xff] %v1653
          %1670 = vst [vmem:[#allocation2 + $0x18] sm:$0xff] %v1654
          %1671 = vst [vmem:[#allocation2 + $0x20] sm:$0xff] %v1655
          %1672 = vst [vmem:[#allocation2 + $0x28] sm:$0xff] %v1656
          %1673 = vst [vmem:[#allocation2 + $0x30] sm:$0xff] %v1657
          %1674 = vst [vmem:[#allocation2 + $0x38] sm:$0xff] %v1658
          %1675 = vst [vmem:[#allocation2 + $0x40] sm:$0xff] %v1659
          %1676 = vst [vmem:[#allocation2 + $0x48] sm:$0xff] %v1660
          %1677 = vst [vmem:[#allocation2 + $0x50] sm:$0xff] %v1661
          %1678 = vst [vmem:[#allocation2 + $0x58] sm:$0xff] %v1662
          %1679 = vst [vmem:[#allocation2 + $0x60] sm:$0xff] %v1663
          %1680 = vst [vmem:[#allocation2 + $0x68] sm:$0xff] %v1664
          %1681 = vst [vmem:[#allocation2 + $0x70] sm:$0xff] %v1665
          %1682 = vst [vmem:[#allocation2 + $0x78] sm:$0xff] %v1666
        $region68: #{tpu_custom_call.1} parent=47 // pred_fallthru
          _
        %v1683 = vld [vmem:[%s384] sm:$0xff]
        %v1684 = vld [vmem:[%s384 + $0x8] sm:$0xff]
        %v1685 = vld [vmem:[%s384 + $0x10] sm:$0xff]
        %v1686 = vld [vmem:[%s384 + $0x18] sm:$0xff]
        %v1687 = vld [vmem:[%s384 + $0x20] sm:$0xff]
        %v1688 = vld [vmem:[%s384 + $0x28] sm:$0xff]
        %v1689 = vld [vmem:[%s384 + $0x30] sm:$0xff]
        %v1690 = vld [vmem:[%s384 + $0x38] sm:$0xff]
        %v1691 = vld [vmem:[%s384 + $0x40] sm:$0xff]
        %v1692 = vld [vmem:[%s384 + $0x48] sm:$0xff]
        %v1693 = vld [vmem:[%s384 + $0x50] sm:$0xff]
        %v1694 = vld [vmem:[%s384 + $0x58] sm:$0xff]
        %v1695 = vld [vmem:[%s384 + $0x60] sm:$0xff]
        %v1696 = vld [vmem:[%s384 + $0x68] sm:$0xff]
        %v1697 = vld [vmem:[%s384 + $0x70] sm:$0xff]
        %v1698 = vld [vmem:[%s384 + $0x78] sm:$0xff]
        %v1699 = vld [vmem:[#allocation2] sm:$0xff]
        %v1700 = vld [vmem:[#allocation2 + $0x8] sm:$0xff]
        %v1701 = vld [vmem:[#allocation2 + $0x10] sm:$0xff]
        %v1702 = vld [vmem:[#allocation2 + $0x18] sm:$0xff]
        %v1703 = vld [vmem:[#allocation2 + $0x20] sm:$0xff]
        %v1704 = vld [vmem:[#allocation2 + $0x28] sm:$0xff]
        %v1705 = vld [vmem:[#allocation2 + $0x30] sm:$0xff]
        %v1706 = vld [vmem:[#allocation2 + $0x38] sm:$0xff]
        %v1707 = vld [vmem:[#allocation2 + $0x40] sm:$0xff]
        %v1708 = vld [vmem:[#allocation2 + $0x48] sm:$0xff]
        %v1709 = vld [vmem:[#allocation2 + $0x50] sm:$0xff]
        %v1710 = vld [vmem:[#allocation2 + $0x58] sm:$0xff]
        %v1711 = vld [vmem:[#allocation2 + $0x60] sm:$0xff]
        %v1712 = vld [vmem:[#allocation2 + $0x68] sm:$0xff]
        %v1713 = vld [vmem:[#allocation2 + $0x70] sm:$0xff]
        %v1714 = vld [vmem:[#allocation2 + $0x78] sm:$0xff]
        %1715 = vmatpush.msra.mxu0 %v1714
        %1716 = vmatpush.msra.mxu0 %v1713
        %1717 = vmatpush.msra.mxu0 %v1712
        %1718 = vmatpush.msra.mxu0 %v1711
        %1719 = vmatpush.msra.mxu0 %v1710
        %1720 = vmatpush.msra.mxu0 %v1709
        %1721 = vmatpush.msra.mxu0 %v1708
        %1722 = vmatpush.msra.mxu0 %v1707
        %1723 = vmatpush.msra.mxu0 %v1706
        %1724 = vmatpush.msra.mxu0 %v1705
        %1725 = vmatpush.msra.mxu0 %v1704
        %1726 = vmatpush.msra.mxu0 %v1703
        %1727 = vmatpush.msra.mxu0 %v1702
        %1728 = vmatpush.msra.mxu0 %v1701
        %1729 = vmatpush.msra.mxu0 %v1700
        %1730 = vmatpush.msra.mxu0 %v1699
        %1731 = vmatmul.f32.gmra.mxu0 %v1683
        %v1732 = vpop.f32.mrf.mxu0
        %v1733 = vadd.f32 0.0, %v1732
        %1734 = vmatmul.f32.gmra.mxu0 %v1684
        %v1735 = vpop.f32.mrf.mxu0
        %v1736 = vadd.f32 0.0, %v1735
        %1737 = vmatmul.f32.gmra.mxu0 %v1685
        %v1738 = vpop.f32.mrf.mxu0
        %v1739 = vadd.f32 0.0, %v1738
        %1740 = vmatmul.f32.gmra.mxu0 %v1686
        %v1741 = vpop.f32.mrf.mxu0
        %v1742 = vadd.f32 0.0, %v1741
        %1743 = vmatmul.f32.gmra.mxu0 %v1687
        %v1744 = vpop.f32.mrf.mxu0
        %v1745 = vadd.f32 0.0, %v1744
        %1746 = vmatmul.f32.gmra.mxu0 %v1688
        %v1747 = vpop.f32.mrf.mxu0
        %v1748 = vadd.f32 0.0, %v1747
        %1749 = vmatmul.f32.gmra.mxu0 %v1689
        %v1750 = vpop.f32.mrf.mxu0
        %v1751 = vadd.f32 0.0, %v1750
        %1752 = vmatmul.f32.gmra.mxu0 %v1690
        %v1753 = vpop.f32.mrf.mxu0
        %v1754 = vadd.f32 0.0, %v1753
        %1755 = vmatmul.f32.gmra.mxu0 %v1691
        %v1756 = vpop.f32.mrf.mxu0
        %v1757 = vadd.f32 0.0, %v1756
        %1758 = vmatmul.f32.gmra.mxu0 %v1692
        %v1759 = vpop.f32.mrf.mxu0
        %v1760 = vadd.f32 0.0, %v1759
        %1761 = vmatmul.f32.gmra.mxu0 %v1693
        %v1762 = vpop.f32.mrf.mxu0
        %v1763 = vadd.f32 0.0, %v1762
        %1764 = vmatmul.f32.gmra.mxu0 %v1694
        %v1765 = vpop.f32.mrf.mxu0
        %v1766 = vadd.f32 0.0, %v1765
        %1767 = vmatmul.f32.gmra.mxu0 %v1695
        %v1768 = vpop.f32.mrf.mxu0
        %v1769 = vadd.f32 0.0, %v1768
        %1770 = vmatmul.f32.gmra.mxu0 %v1696
        %v1771 = vpop.f32.mrf.mxu0
        %v1772 = vadd.f32 0.0, %v1771
        %1773 = vmatmul.f32.gmra.mxu0 %v1697
        %v1774 = vpop.f32.mrf.mxu0
        %v1775 = vadd.f32 0.0, %v1774
        %1776 = vmatmul.f32.gmra.mxu0 %v1698
        %v1777 = vpop.f32.mrf.mxu0
        %v1778 = vadd.f32 0.0, %v1777
        %1779 = vdwg.mxu0
        %v1780 = vld [vmem:[%s390] sm:$0xff]
        %v1781 = vld [vmem:[%s390 + $0x8] sm:$0xff]
        %v1782 = vld [vmem:[%s390 + $0x10] sm:$0xff]
        %v1783 = vld [vmem:[%s390 + $0x18] sm:$0xff]
        %v1784 = vld [vmem:[%s390 + $0x20] sm:$0xff]
        %v1785 = vld [vmem:[%s390 + $0x28] sm:$0xff]
        %v1786 = vld [vmem:[%s390 + $0x30] sm:$0xff]
        %v1787 = vld [vmem:[%s390 + $0x38] sm:$0xff]
        %v1788 = vld [vmem:[%s390 + $0x40] sm:$0xff]
        %v1789 = vld [vmem:[%s390 + $0x48] sm:$0xff]
        %v1790 = vld [vmem:[%s390 + $0x50] sm:$0xff]
        %v1791 = vld [vmem:[%s390 + $0x58] sm:$0xff]
        %v1792 = vld [vmem:[%s390 + $0x60] sm:$0xff]
        %v1793 = vld [vmem:[%s390 + $0x68] sm:$0xff]
        %v1794 = vld [vmem:[%s390 + $0x70] sm:$0xff]
        %v1795 = vld [vmem:[%s390 + $0x78] sm:$0xff]
        %1797 = vset.pattern.permute.xlu0 0
        %1798 = vperm.xlu0 %1797, %v1780
        %v1799 = vpop.permute.xlu0 %1798
        %1802 = vset.pattern.permute.xlu0 0
        %1803 = vperm.xlu0 %1802, %v1781
        %v1804 = vpop.permute.xlu0 %1803
        %1807 = vset.pattern.permute.xlu0 0
        %1808 = vperm.xlu0 %1807, %v1782
        %v1809 = vpop.permute.xlu0 %1808
        %1812 = vset.pattern.permute.xlu0 0
        %1813 = vperm.xlu0 %1812, %v1783
        %v1814 = vpop.permute.xlu0 %1813
        %1817 = vset.pattern.permute.xlu0 0
        %1818 = vperm.xlu0 %1817, %v1784
        %v1819 = vpop.permute.xlu0 %1818
        %1822 = vset.pattern.permute.xlu0 0
        %1823 = vperm.xlu0 %1822, %v1785
        %v1824 = vpop.permute.xlu0 %1823
        %1827 = vset.pattern.permute.xlu0 0
        %1828 = vperm.xlu0 %1827, %v1786
        %v1829 = vpop.permute.xlu0 %1828
        %1832 = vset.pattern.permute.xlu0 0
        %1833 = vperm.xlu0 %1832, %v1787
        %v1834 = vpop.permute.xlu0 %1833
        %1837 = vset.pattern.permute.xlu0 0
        %1838 = vperm.xlu0 %1837, %v1788
        %v1839 = vpop.permute.xlu0 %1838
        %1842 = vset.pattern.permute.xlu0 0
        %1843 = vperm.xlu0 %1842, %v1789
        %v1844 = vpop.permute.xlu0 %1843
        %1847 = vset.pattern.permute.xlu0 0
        %1848 = vperm.xlu0 %1847, %v1790
        %v1849 = vpop.permute.xlu0 %1848
        %1852 = vset.pattern.permute.xlu0 0
        %1853 = vperm.xlu0 %1852, %v1791
        %v1854 = vpop.permute.xlu0 %1853
        %1857 = vset.pattern.permute.xlu0 0
        %1858 = vperm.xlu0 %1857, %v1792
        %v1859 = vpop.permute.xlu0 %1858
        %1862 = vset.pattern.permute.xlu0 0
        %1863 = vperm.xlu0 %1862, %v1793
        %v1864 = vpop.permute.xlu0 %1863
        %1867 = vset.pattern.permute.xlu0 0
        %1868 = vperm.xlu0 %1867, %v1794
        %v1869 = vpop.permute.xlu0 %1868
        %1872 = vset.pattern.permute.xlu0 0
        %1873 = vperm.xlu0 %1872, %v1795
        %v1874 = vpop.permute.xlu0 %1873
        %v1876 = vmul.f32 %v1799, %v1733
        %v1877 = vmul.f32 %v1804, %v1736
        %v1878 = vmul.f32 %v1809, %v1739
        %v1879 = vmul.f32 %v1814, %v1742
        %v1880 = vmul.f32 %v1819, %v1745
        %v1881 = vmul.f32 %v1824, %v1748
        %v1882 = vmul.f32 %v1829, %v1751
        %v1883 = vmul.f32 %v1834, %v1754
        %v1884 = vmul.f32 %v1839, %v1757
        %v1885 = vmul.f32 %v1844, %v1760
        %v1886 = vmul.f32 %v1849, %v1763
        %v1887 = vmul.f32 %v1854, %v1766
        %v1888 = vmul.f32 %v1859, %v1769
        %v1889 = vmul.f32 %v1864, %v1772
        %v1890 = vmul.f32 %v1869, %v1775
        %v1891 = vmul.f32 %v1874, %v1778
        %v1892 = vpack.c.bf16 %v1876, %v1876
        %v1893 = vpack.c.bf16 %v1877, %v1877
        %v1894 = vpack.c.bf16 %v1878, %v1878
        %v1895 = vpack.c.bf16 %v1879, %v1879
        %v1896 = vpack.c.bf16 %v1880, %v1880
        %v1897 = vpack.c.bf16 %v1881, %v1881
        %v1898 = vpack.c.bf16 %v1882, %v1882
        %v1899 = vpack.c.bf16 %v1883, %v1883
        %v1900 = vpack.c.bf16 %v1884, %v1884
        %v1901 = vpack.c.bf16 %v1885, %v1885
        %v1902 = vpack.c.bf16 %v1886, %v1886
        %v1903 = vpack.c.bf16 %v1887, %v1887
        %v1904 = vpack.c.bf16 %v1888, %v1888
        %v1905 = vpack.c.bf16 %v1889, %v1889
        %v1906 = vpack.c.bf16 %v1890, %v1890
        %v1907 = vpack.c.bf16 %v1891, %v1891
        %1908 = vst [vmem:[%s377] sm:$0xf] %v1892
        %1909 = vst [vmem:[%s377 + $0x4] sm:$0xf] %v1893
        %1910 = vst [vmem:[%s377 + $0x8] sm:$0xf] %v1894
        %1911 = vst [vmem:[%s377 + $0xc] sm:$0xf] %v1895
        %1912 = vst [vmem:[%s377 + $0x10] sm:$0xf] %v1896
        %1913 = vst [vmem:[%s377 + $0x14] sm:$0xf] %v1897
        %1914 = vst [vmem:[%s377 + $0x18] sm:$0xf] %v1898
        %1915 = vst [vmem:[%s377 + $0x1c] sm:$0xf] %v1899
        %1916 = vst [vmem:[%s377 + $0x20] sm:$0xf] %v1900
        %1917 = vst [vmem:[%s377 + $0x24] sm:$0xf] %v1901
        %1918 = vst [vmem:[%s377 + $0x28] sm:$0xf] %v1902
        %1919 = vst [vmem:[%s377 + $0x2c] sm:$0xf] %v1903
        %1920 = vst [vmem:[%s377 + $0x30] sm:$0xf] %v1904
        %1921 = vst [vmem:[%s377 + $0x34] sm:$0xf] %v1905
        %1922 = vst [vmem:[%s377 + $0x38] sm:$0xf] %v1906
        %1923 = vst [vmem:[%s377 + $0x3c] sm:$0xf] %v1907
        %p1924 = scmp.eq.s32.totalorder %s27, 1
        // Predicated region
        $region69: #{tpu_custom_call.1} parent=47 // pred_check
          %p1925 = pneg %p1924
        $region70: #{tpu_custom_call.1} parent=47 // pred_check_branch
          %1927 = sbr.rel (%p1925) target = $region72
        $region71: #{tpu_custom_call.1} parent=47 // pred_region
          %v1928 = vld [vmem:[#allocation2] sm:$0xff]
          %v1929 = vld [vmem:[#allocation2 + $0x8] sm:$0xff]
          %v1930 = vld [vmem:[#allocation2 + $0x10] sm:$0xff]
          %v1931 = vld [vmem:[#allocation2 + $0x18] sm:$0xff]
          %v1932 = vld [vmem:[#allocation2 + $0x20] sm:$0xff]
          %v1933 = vld [vmem:[#allocation2 + $0x28] sm:$0xff]
          %v1934 = vld [vmem:[#allocation2 + $0x30] sm:$0xff]
          %v1935 = vld [vmem:[#allocation2 + $0x38] sm:$0xff]
          %v1936 = vld [vmem:[#allocation2 + $0x40] sm:$0xff]
          %v1937 = vld [vmem:[#allocation2 + $0x48] sm:$0xff]
          %v1938 = vld [vmem:[#allocation2 + $0x50] sm:$0xff]
          %v1939 = vld [vmem:[#allocation2 + $0x58] sm:$0xff]
          %v1940 = vld [vmem:[#allocation2 + $0x60] sm:$0xff]
          %v1941 = vld [vmem:[#allocation2 + $0x68] sm:$0xff]
          %v1942 = vld [vmem:[#allocation2 + $0x70] sm:$0xff]
          %v1943 = vld [vmem:[#allocation2 + $0x78] sm:$0xff]
          %1944 = vst [vmem:[#allocation12] sm:$0xff] %v1928
          %1945 = vst [vmem:[#allocation12 + $0x8] sm:$0xff] %v1929
          %1946 = vst [vmem:[#allocation12 + $0x10] sm:$0xff] %v1930
          %1947 = vst [vmem:[#allocation12 + $0x18] sm:$0xff] %v1931
          %1948 = vst [vmem:[#allocation12 + $0x20] sm:$0xff] %v1932
          %1949 = vst [vmem:[#allocation12 + $0x28] sm:$0xff] %v1933
          %1950 = vst [vmem:[#allocation12 + $0x30] sm:$0xff] %v1934
          %1951 = vst [vmem:[#allocation12 + $0x38] sm:$0xff] %v1935
          %1952 = vst [vmem:[#allocation12 + $0x40] sm:$0xff] %v1936
          %1953 = vst [vmem:[#allocation12 + $0x48] sm:$0xff] %v1937
          %1954 = vst [vmem:[#allocation12 + $0x50] sm:$0xff] %v1938
          %1955 = vst [vmem:[#allocation12 + $0x58] sm:$0xff] %v1939
          %1956 = vst [vmem:[#allocation12 + $0x60] sm:$0xff] %v1940
          %1957 = vst [vmem:[#allocation12 + $0x68] sm:$0xff] %v1941
          %1958 = vst [vmem:[#allocation12 + $0x70] sm:$0xff] %v1942
          %1959 = vst [vmem:[#allocation12 + $0x78] sm:$0xff] %v1943
        $region72: #{tpu_custom_call.1} parent=47 // pred_fallthru
          _
        %s1960 = sand.u32 %s192, 1
        %s1961 = scalar_lea.sflag [#allocation5], %s1960
        %s1962 = sand.u32 %s192, 1
        %s1963 = smul.addr %s1962, 64
        %s1964 = scalar_lea.vmem [#allocation11], %s1963
        // Predicated region
        $region73: #{tpu_custom_call.1} parent=47 // pred_check
          %p1965 = pneg %p202
        $region74: #{tpu_custom_call.1} parent=47 // pred_check_branch
          %1967 = sbr.rel (%p1965) target = $region76
        $region75: #{tpu_custom_call.1} parent=47 // pred_region
          %s1968 = smul.u32 16, %s27
          %1970 = vsyncadd %s1961, 0
          %s1971 = smul.addr %s1968, 4
          %s1972 = scalar_lea.hbm %s7, %s1971
          %s1973 = sshll.u32 %s1964, 4
          %s1974 = int_to_ptr.vmem [resolvable:$true] %s1973
          %s1975 = sshll.u32 %s1972, 4
          %s1976 = int_to_ptr.hbm [resolvable:$true] %s1975
          %1981 = dma.vmem_to_hbm [thread:$0]  %s1974, 1024, %s1976, %s1961, 64, 64, 4
        $region76: #{tpu_custom_call.1} parent=47 // pred_fallthru
          _
        // Predicated region
        $region77: #{tpu_custom_call.1} parent=47 // pred_check
          %p1982 = pneg %p223
        $region78: #{tpu_custom_call.1} parent=47 // pred_check_branch
          %1984 = sbr.rel (%p1982) target = $region80
        $region79: #{tpu_custom_call.1} parent=47 // pred_region
          %1986 = vsyncadd [#allocation13], 0
          %s1987 = sshll.u32 [#allocation12], 4
          %s1988 = int_to_ptr.vmem [resolvable:$true] %s1987
          %s1989 = sshll.u32 %s8, 4
          %s1990 = int_to_ptr.hbm [resolvable:$true] %s1989
          %1995 = dma.vmem_to_hbm [thread:$0]  %s1988, 2048, %s1990, [#allocation13], 128, 128, 8
        $region80: #{tpu_custom_call.1} parent=47 // pred_fallthru
          _
        // Predicated region
        $region81: #{tpu_custom_call.1} parent=47 // pred_check
          %p1996 = pneg %p223
        $region82: #{tpu_custom_call.1} parent=47 // pred_check_branch
          %1998 = sbr.rel (%p1996) target = $region84
        $region83: #{tpu_custom_call.1} parent=47 // pred_region
          %2000 = dma.done [#allocation13], 2048
        $region84: #{tpu_custom_call.1} parent=47 // pred_fallthru
          _
      $region48: #{tpu_custom_call.1} parent=5 // pred_fallthru
        _
      %p2001 = scmp.le.s32.totalorder 2, %s22
      // Predicated region
      $region85: #{tpu_custom_call.1} parent=5 // pred_check
        %p2002 = pneg %p2001
      $region86: #{tpu_custom_call.1} parent=5 // pred_check_branch
        %2004 = sbr.rel (%p2002) target = $region88
      $region87: #{tpu_custom_call.1} parent=5 // pred_region
        %s2005 = ssub.s32 %s22, 2
        // Predicated region
        $region89: #{tpu_custom_call.1} parent=87 // pred_check
          %p2006 = pneg %p208
        $region90: #{tpu_custom_call.1} parent=87 // pred_check_branch
          %2008 = sbr.rel (%p2006) target = $region92
        $region91: #{tpu_custom_call.1} parent=87 // pred_region
          %s2009 = sand.u32 %s193, 1
          %s2010 = scalar_lea.sflag [#allocation5], %s2009
          %s2011 = sand.u32 %s193, 1
          %s2012 = smul.addr %s2011, 64
          %s2013 = scalar_lea.vmem [#allocation11], %s2012
          %2015 = dma.done %s2010, 1024
        $region92: #{tpu_custom_call.1} parent=87 // pred_fallthru
          _
      $region88: #{tpu_custom_call.1} parent=5 // pred_fallthru
        _
    $region6: #{tpu_custom_call.1} parent=1 // loop_footer
      %s26 = sadd.s32 1, %s22
    $region7: #{tpu_custom_call.1} parent=1 // loop_footer_branch
      %21 = sbr.rel target = $region3
    $region8: #{tpu_custom_call.1} parent=1 // loop_exit
      _
    %2016 = vsyncpa [#allocation4], 1
    %s2017 = scalar_lea.sflag [#allocation4], 1
    %2018 = vsyncpa %s2017, 1
    %2019 = vsyncpa [#allocation7], 1
    %2020 = vsyncpa [#allocation10], 1
    %2021 = vsyncpa [#allocation5], 1
    %s2022 = scalar_lea.sflag [#allocation5], 1
    %2023 = vsyncpa %s2022, 1
    %2024 = vsyncpa [#allocation13], 1

</llo_original>
